<compile_context>
chip_gen: v5e
topology: v5e:2x2
jax: 0.10.0
libtpu: 0.0.40
codegen_flags: <defaults>
</compile_context>

<pallas_src>
import functools
import math

import jax
import jax.numpy as jnp
from jax import lax
from jax.experimental import pallas as pl
from jax.experimental.pallas import tpu as pltpu


def _mha_kernel(valid_ref,                     # VMEM (B_pad, 1) int32
                q_ref, k_ref, v_ref,           # VMEM (TB,Qt,Dq) / (TB,K,Dk) / (TB,K,Dv)
                wq_ref, wk_ref, wv_ref,        # VMEM (Dq,NH) / (Dk,NH) / (Dv,NH)
                out_ref,                       # VMEM (TB, Qt, NH)
                *maybe_attn_ref,               # optionally VMEM (TB, Qt, H*K)
                num_heads, head_dim):
    attn_ref = maybe_attn_ref[0] if maybe_attn_ref else None
    tb, q_len, dq = q_ref.shape
    _, k_len, dk = k_ref.shape
    dv = v_ref.shape[2]
    nh = num_heads * head_dim
    cdt = q_ref.dtype        # native compute dtype for MXU operands (bf16 stays bf16)

    # --- Input projections: one big (TB*L, D) @ (D, NH) MXU matmul each,
    #     f32 accumulation, then cast back to the input dtype so the attention
    #     matmuls below run the MXU in its native (bf16-capable) mode. ---
    q2 = q_ref[...].reshape(tb * q_len, dq)
    k2 = k_ref[...].reshape(tb * k_len, dk)
    v2 = v_ref[...].reshape(tb * k_len, dv)

    inv_sqrt_d = jnp.float32(1.0 / math.sqrt(head_dim))
    # Scale folded into Q once (saves H*TB*Q*K VALU multiplies per grid step).
    q_proj = (jnp.dot(q2, wq_ref[...], preferred_element_type=jnp.float32)
              * inv_sqrt_d).astype(cdt).reshape(tb, q_len, nh)
    k_proj = jnp.dot(k2, wk_ref[...],
                     preferred_element_type=jnp.float32).astype(cdt).reshape(tb, k_len, nh)
    v_proj = jnp.dot(v2, wv_ref[...],
                     preferred_element_type=jnp.float32).astype(cdt).reshape(tb, k_len, nh)

    # --- Key-validity mask, vectorized and built ONCE per grid step:
    #     (TB,1) valid-lens column vs. a single broadcasted iota. ---
    base = pl.multiple_of(pl.program_id(0) * tb, tb)
    vl = valid_ref[pl.ds(base, tb), :]                          # (TB, 1) int32
    col = lax.broadcasted_iota(jnp.int32, (tb, 1, k_len), 2)    # (TB, 1, K)
    keep = col < vl[:, :, None]                                 # (TB, 1, K) bool

    neg = jnp.float32(-1000000.0)   # exact sequence_mask fill value of the reference

    # Static unroll over heads (num_heads is small); each head stores its
    # outputs immediately so nothing stays live across iterations.
    # TODO(synk): for very long K, switch to a flash-style streaming softmax
    # over K tiles (a K grid axis with running max/sum accumulators).
    for h in range(num_heads):
        sl = slice(h * head_dim, (h + 1) * head_dim)
        # Batched QK^T contracting on the head dim (no explicit transpose).
        s = jnp.einsum('bqd,bkd->bqk', q_proj[:, :, sl], k_proj[:, :, sl],
                       preferred_element_type=jnp.float32)      # (TB, Qt, K) f32
        # sequence_mask semantics: masked key positions are REPLACED by -1e6.
        s = jnp.where(keep, s, neg)

        m = jnp.max(s, axis=-1, keepdims=True)
        e = jnp.exp(s - m)
        # Reciprocal on the EUP slot instead of a VALU divide.
        w = e * pl.reciprocal(jnp.sum(e, axis=-1, keepdims=True), approx=True)

        ctx = jnp.einsum('bqk,bkd->bqd', w.astype(cdt), v_proj[:, :, sl],
                         preferred_element_type=jnp.float32)    # (TB, Qt, dh) f32
        out_ref[:, :, sl] = ctx.astype(out_ref.dtype)
        if attn_ref is not None:
            # K-wide store (lane-dense for K a multiple of 128).
            attn_ref[:, :, h * k_len:(h + 1) * k_len] = w.astype(attn_ref.dtype)


def _step_vmem_bytes(bb, bq, K, Dq, Dk, Dv, NH, H, itemsize, out_attn):
    """Rough per-grid-step VMEM footprint (double-buffered I/O + intermediates)."""
    io = 2 * itemsize * bb * (bq * Dq + K * (Dk + Dv) + bq * NH
                              + (bq * H * K if out_attn else 0))
    wgt = 2 * itemsize * (Dq + Dk + Dv) * NH
    # f32 projections + one head's scores / exp / weights.
    f32 = 4 * bb * (bq * NH + 2 * K * NH + 3 * bq * K)
    return io + wgt + f32


def multi_head_attention(queries, keys, values, w_q, w_k, w_v, valid_lens,
                         num_heads, *, output_attentions=True, block_b=None,
                         block_q=None, attn_dtype=None,
                         vmem_budget_bytes=24 << 20):
    """Returns (output_concat [B,Q,NH], weight_concat [B,Q,H*K]) or (output_concat,)."""
    B, Q, Dq = queries.shape
    _, K, Dk = keys.shape
    _, _, Dv = values.shape
    NH = w_q.shape[1]
    assert NH % num_heads == 0
    head_dim = NH // num_heads
    itemsize = jnp.dtype(queries.dtype).itemsize

    # TODO(synk): only 1-D per-batch valid_lens (or None) is supported; the
    # reference's 2-D per-query valid_lens path is not implemented here.
    if valid_lens is None:
        valid_lens = jnp.full((B,), K, dtype=jnp.int32)
    valid_lens = valid_lens.astype(jnp.int32).reshape(B)

    # --- Q tiling: keeps the per-step footprint bounded for long sequences. ---
    if block_q is None:
        block_q = Q if Q <= 128 else 128
    block_q = max(1, min(block_q, Q))
    q_pad = -(-Q // block_q) * block_q

    # --- Batch packing, sized against a VMEM budget conservative enough for
    #     v7x's 64 MiB physical VMEM (v5e/v6e have more headroom). ---
    if block_b is None:
        block_b = max(1, min(8, B))
        while block_b > 1 and _step_vmem_bytes(
                block_b, block_q, K, Dq, Dk, Dv, NH, num_heads, itemsize,
                output_attentions) > vmem_budget_bytes:
            block_b = (block_b + 1) // 2
        # v7x has two TensorCores: keep >= 2 parallel grid steps when possible.
        if (-(-B // block_b)) * (q_pad // block_q) < 2 and block_b > 1:
            block_b = (block_b + 1) // 2
    block_b = max(1, min(block_b, B))
    B_pad = -(-B // block_b) * block_b

    if B_pad != B:
        pad = B_pad - B
        pad3 = ((0, pad), (0, 0), (0, 0))
        queries = jnp.pad(queries, pad3)
        keys = jnp.pad(keys, pad3)
        values = jnp.pad(values, pad3)
        valid_lens = jnp.concatenate(
            [valid_lens, jnp.full((pad,), K, jnp.int32)])
    if q_pad != Q:
        queries = jnp.pad(queries, ((0, 0), (0, q_pad - Q), (0, 0)))

    valid2d = valid_lens.reshape(B_pad, 1)

    est = _step_vmem_bytes(block_b, block_q, K, Dq, Dk, Dv, NH, num_heads,
                           itemsize, output_attentions)
    # Explicit scoped-VMEM limit with headroom, capped below v7x's 64 MiB.
    vmem_limit = int(min(max(2 * est, 32 << 20), 48 << 20))

    if attn_dtype is None:
        attn_dtype = queries.dtype

    kernel = functools.partial(_mha_kernel, num_heads=num_heads,
                               head_dim=head_dim)

    grid = (B_pad // block_b, q_pad // block_q)
    in_specs = [
        pl.BlockSpec((B_pad, 1), lambda i, j: (0, 0)),                 # valid lens
        pl.BlockSpec((block_b, block_q, Dq), lambda i, j: (i, j, 0)),  # queries
        pl.BlockSpec((block_b, K, Dk), lambda i, j: (i, 0, 0)),        # keys
        pl.BlockSpec((block_b, K, Dv), lambda i, j: (i, 0, 0)),        # values
        pl.BlockSpec((Dq, NH), lambda i, j: (0, 0)),                   # W_q
        pl.BlockSpec((Dk, NH), lambda i, j: (0, 0)),                   # W_k
        pl.BlockSpec((Dv, NH), lambda i, j: (0, 0)),                   # W_v
    ]
    out_specs = [pl.BlockSpec((block_b, block_q, NH), lambda i, j: (i, j, 0))]
    out_shape = [jax.ShapeDtypeStruct((B_pad, q_pad, NH), queries.dtype)]
    if output_attentions:
        out_specs.append(
            pl.BlockSpec((block_b, block_q, num_heads * K), lambda i, j: (i, j, 0)))
        out_shape.append(
            jax.ShapeDtypeStruct((B_pad, q_pad, num_heads * K), attn_dtype))

    results = pl.pallas_call(
        kernel,
        grid=grid,
        in_specs=in_specs,
        out_specs=out_specs,
        out_shape=out_shape,
        compiler_params=pltpu.CompilerParams(
            dimension_semantics=("parallel", "parallel"),
            vmem_limit_bytes=vmem_limit),
    )(valid2d, queries, keys, values, w_q, w_k, w_v)

    out = results[0][:B, :Q]
    if output_attentions:
        return out, results[1][:B, :Q]
    return (out,)


def _reference(queries, keys, values, w_q, w_k, w_v, valid_lens, num_heads):
    """Pure-JAX re-statement of the PyTorch forward for verification."""
    B, Q, _ = queries.shape
    K = keys.shape[1]
    NH = w_q.shape[1]
    dh = NH // num_heads

    def tqkv(x):  # transpose_qkv
        L = x.shape[1]
        return x.reshape(B, L, num_heads, dh).transpose(0, 2, 1, 3).reshape(
            B * num_heads, L, dh)

    q = tqkv(queries @ w_q)
    k = tqkv(keys @ w_k)
    v = tqkv(values @ w_v)
    scores = jnp.einsum('bqd,bkd->bqk', q, k) / math.sqrt(dh)
    if valid_lens is not None:
        vl = jnp.repeat(valid_lens, num_heads)
        col = jnp.arange(K)[None, None, :]
        scores = jnp.where(col < vl[:, None, None], scores, -1000000.0)
    w = jax.nn.softmax(scores, axis=-1)
    out = jnp.einsum('bqk,bkd->bqd', w, v)

    def tout(x):  # transpose_output
        return x.reshape(B, num_heads, Q, -1).transpose(0, 2, 1, 3).reshape(B, Q, -1)

    return tout(out), tout(w)


if __name__ == "__main__":
    # Small shapes consistent with the module.
    B, Q, K = 6, 8, 8
    query_size = key_size = value_size = 16
    num_hiddens, num_heads = 32, 4

    key = jax.random.PRNGKey(0)
    kq, kk, kv, kwq, kwk, kwv = jax.random.split(key, 6)

    queries = jax.random.normal(kq, (B, Q, query_size), dtype=jnp.float32)
    keys_in = jax.random.normal(kk, (B, K, key_size), dtype=jnp.float32)
    values_in = jax.random.normal(kv, (B, K, value_size), dtype=jnp.float32)

    # Deterministic synthetic weights (stored as (in, out)).
    def init_w(k, fan_in, fan_out):
        bound = 1.0 / math.sqrt(fan_in)
        return jax.random.uniform(k, (fan_in, fan_out), jnp.float32, -bound, bound)

    w_q = init_w(kwq, query_size, num_hiddens)
    w_k = init_w(kwk, key_size, num_hiddens)
    w_v = init_w(kwv, value_size, num_hiddens)
    # TODO(synk): W_o exists in __init__ but is never used by the PyTorch forward, so it is omitted.

    valid_lens = jnp.array([5, 7, 3, 8, 6, 4], dtype=jnp.int32)

    # Auto block selection (also exercises the ">= 2 parallel grid steps" rule).
    out, attn = multi_head_attention(queries, keys_in, values_in,
                                     w_q, w_k, w_v, valid_lens, num_heads,
                                     output_attentions=True)
    jax.block_until_ready((out, attn))

    ref_out, ref_attn = _reference(queries, keys_in, values_in,
                                   w_q, w_k, w_v, valid_lens, num_heads)
    assert out.shape == (B, Q, num_hiddens)
    assert attn.shape == (B, Q, num_heads * K)
    # Tolerance accounts for the approximate EUP reciprocal in the softmax
    # normalization (purely multiplicative per-row error, well under 0.5%).
    assert jnp.allclose(out, ref_out, atol=5e-3, rtol=5e-3)
    assert jnp.allclose(attn, ref_attn, atol=5e-3, rtol=5e-3)

    # Context-only path with explicit block_b=4: exercises batch padding
    # (6 -> 8) and skips the (B, Q, H*K) attention-weights writeback entirely.
    (out_only,) = multi_head_attention(queries, keys_in, values_in,
                                       w_q, w_k, w_v, valid_lens, num_heads,
                                       output_attentions=False, block_b=4)
    jax.block_until_ready(out_only)
    assert jnp.allclose(out_only, ref_out, atol=5e-3, rtol=5e-3)

    print("KERNEL_OK")
</pallas_src>

<mosaic_0001>
module attributes {stable_mosaic.version = 11 : i64} {
  func.func @_mha_kernel(%arg0: i32, %arg1: i32, %arg2: memref<6x1xi32, #tpu.memory_space<vmem>>, %arg3: memref<3x8x16xf32, #tpu.memory_space<vmem>>, %arg4: memref<3x8x16xf32, #tpu.memory_space<vmem>>, %arg5: memref<3x8x16xf32, #tpu.memory_space<vmem>>, %arg6: memref<16x32xf32, #tpu.memory_space<vmem>>, %arg7: memref<16x32xf32, #tpu.memory_space<vmem>>, %arg8: memref<16x32xf32, #tpu.memory_space<vmem>>, %arg9: memref<3x8x32xf32, #tpu.memory_space<vmem>>, %arg10: memref<3x8x32xf32, #tpu.memory_space<vmem>>) attributes {dimension_semantics = [#tpu.dimension_semantics<parallel>, #tpu.dimension_semantics<parallel>], iteration_bounds = array<i64: 2, 1>, scalar_prefetch = 0 : i64, scratch_operands = 0 : i64, tpu.core_type = #tpu.core_type<tc>, window_params = [{pipeline_mode = #tpu.pipeline_mode<synchronous>, transform_indices = @transform_0, window_bounds = array<i64: 6, 1>}, {transform_indices = @transform_1, window_bounds = array<i64: 3, 8, 16>}, {transform_indices = @transform_2, window_bounds = array<i64: 3, 8, 16>}, {transform_indices = @transform_3, window_bounds = array<i64: 3, 8, 16>}, {pipeline_mode = #tpu.pipeline_mode<synchronous>, transform_indices = @transform_4, window_bounds = array<i64: 16, 32>}, {pipeline_mode = #tpu.pipeline_mode<synchronous>, transform_indices = @transform_5, window_bounds = array<i64: 16, 32>}, {pipeline_mode = #tpu.pipeline_mode<synchronous>, transform_indices = @transform_6, window_bounds = array<i64: 16, 32>}, {transform_indices = @transform_7, window_bounds = array<i64: 3, 8, 32>}, {transform_indices = @transform_8, window_bounds = array<i64: 3, 8, 32>}]} {
    %c0 = arith.constant 0 : index
    %c0_0 = arith.constant 0 : index
    %c0_1 = arith.constant 0 : index
    %0 = vector.load %arg3[%c0, %c0_0, %c0_1] : memref<3x8x16xf32, #tpu.memory_space<vmem>>, vector<3x8x16xf32>
    %1 = vector.shape_cast %0 : vector<3x8x16xf32> to vector<24x16xf32>
    %c0_2 = arith.constant 0 : index
    %c0_3 = arith.constant 0 : index
    %c0_4 = arith.constant 0 : index
    %2 = vector.load %arg4[%c0_2, %c0_3, %c0_4] : memref<3x8x16xf32, #tpu.memory_space<vmem>>, vector<3x8x16xf32>
    %3 = vector.shape_cast %2 : vector<3x8x16xf32> to vector<24x16xf32>
    %c0_5 = arith.constant 0 : index
    %c0_6 = arith.constant 0 : index
    %c0_7 = arith.constant 0 : index
    %4 = vector.load %arg5[%c0_5, %c0_6, %c0_7] : memref<3x8x16xf32, #tpu.memory_space<vmem>>, vector<3x8x16xf32>
    %5 = vector.shape_cast %4 : vector<3x8x16xf32> to vector<24x16xf32>
    %c0_8 = arith.constant 0 : index
    %c0_9 = arith.constant 0 : index
    %6 = vector.load %arg6[%c0_8, %c0_9] : memref<16x32xf32, #tpu.memory_space<vmem>>, vector<16x32xf32>
    %cst = arith.constant dense<0.000000e+00> : vector<24x32xf32>
    %7 = tpu.matmul %1, %6, %cst {dimension_numbers = #tpu.dot_dimension_numbers<[1], [0], [0], [1], [0, 0, 1, 1], [], []>} : vector<24x16xf32>, vector<16x32xf32>, vector<24x32xf32> -> vector<24x32xf32>
    %cst_10 = arith.constant 0.353553385 : f32
    %8 = vector.broadcast %cst_10 : f32 to vector<24x32xf32>
    %9 = arith.mulf %7, %8 : vector<24x32xf32>
    %10 = vector.shape_cast %9 : vector<24x32xf32> to vector<3x8x32xf32>
    %c0_11 = arith.constant 0 : index
    %c0_12 = arith.constant 0 : index
    %11 = vector.load %arg7[%c0_11, %c0_12] : memref<16x32xf32, #tpu.memory_space<vmem>>, vector<16x32xf32>
    %cst_13 = arith.constant dense<0.000000e+00> : vector<24x32xf32>
    %12 = tpu.matmul %3, %11, %cst_13 {dimension_numbers = #tpu.dot_dimension_numbers<[1], [0], [0], [1], [0, 0, 1, 1], [], []>} : vector<24x16xf32>, vector<16x32xf32>, vector<24x32xf32> -> vector<24x32xf32>
    %13 = vector.shape_cast %12 : vector<24x32xf32> to vector<3x8x32xf32>
    %c0_14 = arith.constant 0 : index
    %c0_15 = arith.constant 0 : index
    %14 = vector.load %arg8[%c0_14, %c0_15] : memref<16x32xf32, #tpu.memory_space<vmem>>, vector<16x32xf32>
    %cst_16 = arith.constant dense<0.000000e+00> : vector<24x32xf32>
    %15 = tpu.matmul %5, %14, %cst_16 {dimension_numbers = #tpu.dot_dimension_numbers<[1], [0], [0], [1], [0, 0, 1, 1], [], []>} : vector<24x16xf32>, vector<16x32xf32>, vector<24x32xf32> -> vector<24x32xf32>
    %16 = vector.shape_cast %15 : vector<24x32xf32> to vector<3x8x32xf32>
    %c3_i32 = arith.constant 3 : i32
    %17 = arith.muli %arg0, %c3_i32 : i32
    %18 = tpu.assume_multiple %17, 3 : i32
    %19 = arith.index_cast %18 : i32 to index
    %c0_17 = arith.constant 0 : index
    %20 = vector.load %arg2[%19, %c0_17] : memref<6x1xi32, #tpu.memory_space<vmem>>, vector<3x1xi32>
    %21 = tpu.iota {dimensions = array<i32: 2>} : vector<3x1x8xi32>
    %22 = vector.shape_cast %20 : vector<3x1xi32> to vector<3x1x1xi32>
    %23 = vector.broadcast %22 : vector<3x1x1xi32> to vector<3x1x8xi32>
    %24 = arith.cmpi slt, %21, %23 : vector<3x1x8xi32>
    %25 = vector.extract_strided_slice %10 {offsets = [0, 0, 0], sizes = [3, 8, 8], strides = [1, 1, 1]} : vector<3x8x32xf32> to vector<3x8x8xf32>
    %26 = vector.extract_strided_slice %13 {offsets = [0, 0, 0], sizes = [3, 8, 8], strides = [1, 1, 1]} : vector<3x8x32xf32> to vector<3x8x8xf32>
    "tpu.trace_start"() <{level = 10 : i32, message = "bqd,bkd->bqk"}> : () -> ()
    %cst_18 = arith.constant dense<0.000000e+00> : vector<3x8x8xf32>
    %27 = tpu.matmul %25, %26, %cst_18 {dimension_numbers = #tpu.dot_dimension_numbers<[2], [2], [1], [1], [0, 0, 0, 1, 1, 1], [0], [0]>} : vector<3x8x8xf32>, vector<3x8x8xf32>, vector<3x8x8xf32> -> vector<3x8x8xf32>
    %cst_19 = arith.constant -1.000000e+06 : f32
    "tpu.trace_stop"() : () -> ()
    %28 = vector.shape_cast %24 : vector<3x1x8xi1> to vector<3x1x8xi1>
    %29 = vector.broadcast %28 : vector<3x1x8xi1> to vector<3x8x8xi1>
    %30 = vector.broadcast %cst_19 : f32 to vector<3x8x8xf32>
    %31 = arith.select %29, %27, %30 : vector<3x8x8xi1>, vector<3x8x8xf32>
    %cst_20 = arith.constant dense<0xFF800000> : vector<3x8xf32>
    %32 = vector.multi_reduction <maximumf>, %31, %cst_20 [2] : vector<3x8x8xf32> to vector<3x8xf32>
    %33 = vector.shape_cast %32 : vector<3x8xf32> to vector<3x8x1xf32>
    %34 = vector.broadcast %33 : vector<3x8x1xf32> to vector<3x8x8xf32>
    %35 = arith.subf %31, %34 : vector<3x8x8xf32>
    %36 = math.exp %35 : vector<3x8x8xf32>
    %cst_21 = arith.constant dense<0.000000e+00> : vector<3x8xf32>
    %37 = vector.multi_reduction <add>, %36, %cst_21 [2] : vector<3x8x8xf32> to vector<3x8xf32>
    %38 = vector.shape_cast %37 : vector<3x8xf32> to vector<3x8x1xf32>
    %39 = tpu.reciprocal %38 {approx = true} : vector<3x8x1xf32> -> vector<3x8x1xf32>
    %40 = vector.broadcast %39 : vector<3x8x1xf32> to vector<3x8x8xf32>
    %41 = arith.mulf %36, %40 : vector<3x8x8xf32>
    %42 = vector.extract_strided_slice %16 {offsets = [0, 0, 0], sizes = [3, 8, 8], strides = [1, 1, 1]} : vector<3x8x32xf32> to vector<3x8x8xf32>
    "tpu.trace_start"() <{level = 10 : i32, message = "bqk,bkd->bqd"}> : () -> ()
    %cst_22 = arith.constant dense<0.000000e+00> : vector<3x8x8xf32>
    %43 = tpu.matmul %41, %42, %cst_22 {dimension_numbers = #tpu.dot_dimension_numbers<[2], [1], [1], [2], [0, 0, 0, 1, 1, 2], [0], [0]>} : vector<3x8x8xf32>, vector<3x8x8xf32>, vector<3x8x8xf32> -> vector<3x8x8xf32>
    "tpu.trace_stop"() : () -> ()
    %c0_23 = arith.constant 0 : index
    %c0_24 = arith.constant 0 : index
    %c0_25 = arith.constant 0 : index
    %44 = vector.load %arg9[%c0_23, %c0_24, %c0_25] : memref<3x8x32xf32, #tpu.memory_space<vmem>>, vector<3x8x8xf32>
    tpu.vector_store %arg9[%c0_23, %c0_24, %c0_25], %43 {strides = array<i32>} : memref<3x8x32xf32, #tpu.memory_space<vmem>>, vector<3x8x8xf32>,
    %c0_26 = arith.constant 0 : index
    %c0_27 = arith.constant 0 : index
    %c0_28 = arith.constant 0 : index
    %45 = vector.load %arg10[%c0_26, %c0_27, %c0_28] : memref<3x8x32xf32, #tpu.memory_space<vmem>>, vector<3x8x8xf32>
    tpu.vector_store %arg10[%c0_26, %c0_27, %c0_28], %41 {strides = array<i32>} : memref<3x8x32xf32, #tpu.memory_space<vmem>>, vector<3x8x8xf32>,
    %46 = vector.extract_strided_slice %10 {offsets = [0, 0, 8], sizes = [3, 8, 8], strides = [1, 1, 1]} : vector<3x8x32xf32> to vector<3x8x8xf32>
    %47 = vector.extract_strided_slice %13 {offsets = [0, 0, 8], sizes = [3, 8, 8], strides = [1, 1, 1]} : vector<3x8x32xf32> to vector<3x8x8xf32>
    "tpu.trace_start"() <{level = 10 : i32, message = "bqd,bkd->bqk"}> : () -> ()
    %cst_29 = arith.constant dense<0.000000e+00> : vector<3x8x8xf32>
    %48 = tpu.matmul %46, %47, %cst_29 {dimension_numbers = #tpu.dot_dimension_numbers<[2], [2], [1], [1], [0, 0, 0, 1, 1, 1], [0], [0]>} : vector<3x8x8xf32>, vector<3x8x8xf32>, vector<3x8x8xf32> -> vector<3x8x8xf32>
    %cst_30 = arith.constant -1.000000e+06 : f32
    "tpu.trace_stop"() : () -> ()
    %49 = vector.shape_cast %24 : vector<3x1x8xi1> to vector<3x1x8xi1>
    %50 = vector.broadcast %49 : vector<3x1x8xi1> to vector<3x8x8xi1>
    %51 = vector.broadcast %cst_30 : f32 to vector<3x8x8xf32>
    %52 = arith.select %50, %48, %51 : vector<3x8x8xi1>, vector<3x8x8xf32>
    %cst_31 = arith.constant dense<0xFF800000> : vector<3x8xf32>
    %53 = vector.multi_reduction <maximumf>, %52, %cst_31 [2] : vector<3x8x8xf32> to vector<3x8xf32>
    %54 = vector.shape_cast %53 : vector<3x8xf32> to vector<3x8x1xf32>
    %55 = vector.broadcast %54 : vector<3x8x1xf32> to vector<3x8x8xf32>
    %56 = arith.subf %52, %55 : vector<3x8x8xf32>
    %57 = math.exp %56 : vector<3x8x8xf32>
    %cst_32 = arith.constant dense<0.000000e+00> : vector<3x8xf32>
    %58 = vector.multi_reduction <add>, %57, %cst_32 [2] : vector<3x8x8xf32> to vector<3x8xf32>
    %59 = vector.shape_cast %58 : vector<3x8xf32> to vector<3x8x1xf32>
    %60 = tpu.reciprocal %59 {approx = true} : vector<3x8x1xf32> -> vector<3x8x1xf32>
    %61 = vector.broadcast %60 : vector<3x8x1xf32> to vector<3x8x8xf32>
    %62 = arith.mulf %57, %61 : vector<3x8x8xf32>
    %63 = vector.extract_strided_slice %16 {offsets = [0, 0, 8], sizes = [3, 8, 8], strides = [1, 1, 1]} : vector<3x8x32xf32> to vector<3x8x8xf32>
    "tpu.trace_start"() <{level = 10 : i32, message = "bqk,bkd->bqd"}> : () -> ()
    %cst_33 = arith.constant dense<0.000000e+00> : vector<3x8x8xf32>
    %64 = tpu.matmul %62, %63, %cst_33 {dimension_numbers = #tpu.dot_dimension_numbers<[2], [1], [1], [2], [0, 0, 0, 1, 1, 2], [0], [0]>} : vector<3x8x8xf32>, vector<3x8x8xf32>, vector<3x8x8xf32> -> vector<3x8x8xf32>
    "tpu.trace_stop"() : () -> ()
    %c0_34 = arith.constant 0 : index
    %c0_35 = arith.constant 0 : index
    %c8 = arith.constant 8 : index
    %65 = vector.load %arg9[%c0_34, %c0_35, %c8] : memref<3x8x32xf32, #tpu.memory_space<vmem>>, vector<3x8x8xf32>
    tpu.vector_store %arg9[%c0_34, %c0_35, %c8], %64 {strides = array<i32>} : memref<3x8x32xf32, #tpu.memory_space<vmem>>, vector<3x8x8xf32>,
    %c0_36 = arith.constant 0 : index
    %c0_37 = arith.constant 0 : index
    %c8_38 = arith.constant 8 : index
    %66 = vector.load %arg10[%c0_36, %c0_37, %c8_38] : memref<3x8x32xf32, #tpu.memory_space<vmem>>, vector<3x8x8xf32>
    tpu.vector_store %arg10[%c0_36, %c0_37, %c8_38], %62 {strides = array<i32>} : memref<3x8x32xf32, #tpu.memory_space<vmem>>, vector<3x8x8xf32>,
    %67 = vector.extract_strided_slice %10 {offsets = [0, 0, 16], sizes = [3, 8, 8], strides = [1, 1, 1]} : vector<3x8x32xf32> to vector<3x8x8xf32>
    %68 = vector.extract_strided_slice %13 {offsets = [0, 0, 16], sizes = [3, 8, 8], strides = [1, 1, 1]} : vector<3x8x32xf32> to vector<3x8x8xf32>
    "tpu.trace_start"() <{level = 10 : i32, message = "bqd,bkd->bqk"}> : () -> ()
    %cst_39 = arith.constant dense<0.000000e+00> : vector<3x8x8xf32>
    %69 = tpu.matmul %67, %68, %cst_39 {dimension_numbers = #tpu.dot_dimension_numbers<[2], [2], [1], [1], [0, 0, 0, 1, 1, 1], [0], [0]>} : vector<3x8x8xf32>, vector<3x8x8xf32>, vector<3x8x8xf32> -> vector<3x8x8xf32>
    %cst_40 = arith.constant -1.000000e+06 : f32
    "tpu.trace_stop"() : () -> ()
    %70 = vector.shape_cast %24 : vector<3x1x8xi1> to vector<3x1x8xi1>
    %71 = vector.broadcast %70 : vector<3x1x8xi1> to vector<3x8x8xi1>
    %72 = vector.broadcast %cst_40 : f32 to vector<3x8x8xf32>
    %73 = arith.select %71, %69, %72 : vector<3x8x8xi1>, vector<3x8x8xf32>
    %cst_41 = arith.constant dense<0xFF800000> : vector<3x8xf32>
    %74 = vector.multi_reduction <maximumf>, %73, %cst_41 [2] : vector<3x8x8xf32> to vector<3x8xf32>
    %75 = vector.shape_cast %74 : vector<3x8xf32> to vector<3x8x1xf32>
    %76 = vector.broadcast %75 : vector<3x8x1xf32> to vector<3x8x8xf32>
    %77 = arith.subf %73, %76 : vector<3x8x8xf32>
    %78 = math.exp %77 : vector<3x8x8xf32>
    %cst_42 = arith.constant dense<0.000000e+00> : vector<3x8xf32>
    %79 = vector.multi_reduction <add>, %78, %cst_42 [2] : vector<3x8x8xf32> to vector<3x8xf32>
    %80 = vector.shape_cast %79 : vector<3x8xf32> to vector<3x8x1xf32>
    %81 = tpu.reciprocal %80 {approx = true} : vector<3x8x1xf32> -> vector<3x8x1xf32>
    %82 = vector.broadcast %81 : vector<3x8x1xf32> to vector<3x8x8xf32>
    %83 = arith.mulf %78, %82 : vector<3x8x8xf32>
    %84 = vector.extract_strided_slice %16 {offsets = [0, 0, 16], sizes = [3, 8, 8], strides = [1, 1, 1]} : vector<3x8x32xf32> to vector<3x8x8xf32>
    "tpu.trace_start"() <{level = 10 : i32, message = "bqk,bkd->bqd"}> : () -> ()
    %cst_43 = arith.constant dense<0.000000e+00> : vector<3x8x8xf32>
    %85 = tpu.matmul %83, %84, %cst_43 {dimension_numbers = #tpu.dot_dimension_numbers<[2], [1], [1], [2], [0, 0, 0, 1, 1, 2], [0], [0]>} : vector<3x8x8xf32>, vector<3x8x8xf32>, vector<3x8x8xf32> -> vector<3x8x8xf32>
    "tpu.trace_stop"() : () -> ()
    %c0_44 = arith.constant 0 : index
    %c0_45 = arith.constant 0 : index
    %c16 = arith.constant 16 : index
    %86 = vector.load %arg9[%c0_44, %c0_45, %c16] : memref<3x8x32xf32, #tpu.memory_space<vmem>>, vector<3x8x8xf32>
    tpu.vector_store %arg9[%c0_44, %c0_45, %c16], %85 {strides = array<i32>} : memref<3x8x32xf32, #tpu.memory_space<vmem>>, vector<3x8x8xf32>,
    %c0_46 = arith.constant 0 : index
    %c0_47 = arith.constant 0 : index
    %c16_48 = arith.constant 16 : index
    %87 = vector.load %arg10[%c0_46, %c0_47, %c16_48] : memref<3x8x32xf32, #tpu.memory_space<vmem>>, vector<3x8x8xf32>
    tpu.vector_store %arg10[%c0_46, %c0_47, %c16_48], %83 {strides = array<i32>} : memref<3x8x32xf32, #tpu.memory_space<vmem>>, vector<3x8x8xf32>,
    %88 = vector.extract_strided_slice %10 {offsets = [0, 0, 24], sizes = [3, 8, 8], strides = [1, 1, 1]} : vector<3x8x32xf32> to vector<3x8x8xf32>
    %89 = vector.extract_strided_slice %13 {offsets = [0, 0, 24], sizes = [3, 8, 8], strides = [1, 1, 1]} : vector<3x8x32xf32> to vector<3x8x8xf32>
    "tpu.trace_start"() <{level = 10 : i32, message = "bqd,bkd->bqk"}> : () -> ()
    %cst_49 = arith.constant dense<0.000000e+00> : vector<3x8x8xf32>
    %90 = tpu.matmul %88, %89, %cst_49 {dimension_numbers = #tpu.dot_dimension_numbers<[2], [2], [1], [1], [0, 0, 0, 1, 1, 1], [0], [0]>} : vector<3x8x8xf32>, vector<3x8x8xf32>, vector<3x8x8xf32> -> vector<3x8x8xf32>
    %cst_50 = arith.constant -1.000000e+06 : f32
    "tpu.trace_stop"() : () -> ()
    %91 = vector.shape_cast %24 : vector<3x1x8xi1> to vector<3x1x8xi1>
    %92 = vector.broadcast %91 : vector<3x1x8xi1> to vector<3x8x8xi1>
    %93 = vector.broadcast %cst_50 : f32 to vector<3x8x8xf32>
    %94 = arith.select %92, %90, %93 : vector<3x8x8xi1>, vector<3x8x8xf32>
    %cst_51 = arith.constant dense<0xFF800000> : vector<3x8xf32>
    %95 = vector.multi_reduction <maximumf>, %94, %cst_51 [2] : vector<3x8x8xf32> to vector<3x8xf32>
    %96 = vector.shape_cast %95 : vector<3x8xf32> to vector<3x8x1xf32>
    %97 = vector.broadcast %96 : vector<3x8x1xf32> to vector<3x8x8xf32>
    %98 = arith.subf %94, %97 : vector<3x8x8xf32>
    %99 = math.exp %98 : vector<3x8x8xf32>
    %cst_52 = arith.constant dense<0.000000e+00> : vector<3x8xf32>
    %100 = vector.multi_reduction <add>, %99, %cst_52 [2] : vector<3x8x8xf32> to vector<3x8xf32>
    %101 = vector.shape_cast %100 : vector<3x8xf32> to vector<3x8x1xf32>
    %102 = tpu.reciprocal %101 {approx = true} : vector<3x8x1xf32> -> vector<3x8x1xf32>
    %103 = vector.broadcast %102 : vector<3x8x1xf32> to vector<3x8x8xf32>
    %104 = arith.mulf %99, %103 : vector<3x8x8xf32>
    %105 = vector.extract_strided_slice %16 {offsets = [0, 0, 24], sizes = [3, 8, 8], strides = [1, 1, 1]} : vector<3x8x32xf32> to vector<3x8x8xf32>
    "tpu.trace_start"() <{level = 10 : i32, message = "bqk,bkd->bqd"}> : () -> ()
    %cst_53 = arith.constant dense<0.000000e+00> : vector<3x8x8xf32>
    %106 = tpu.matmul %104, %105, %cst_53 {dimension_numbers = #tpu.dot_dimension_numbers<[2], [1], [1], [2], [0, 0, 0, 1, 1, 2], [0], [0]>} : vector<3x8x8xf32>, vector<3x8x8xf32>, vector<3x8x8xf32> -> vector<3x8x8xf32>
    "tpu.trace_stop"() : () -> ()
    %c0_54 = arith.constant 0 : index
    %c0_55 = arith.constant 0 : index
    %c24 = arith.constant 24 : index
    %107 = vector.load %arg9[%c0_54, %c0_55, %c24] : memref<3x8x32xf32, #tpu.memory_space<vmem>>, vector<3x8x8xf32>
    tpu.vector_store %arg9[%c0_54, %c0_55, %c24], %106 {strides = array<i32>} : memref<3x8x32xf32, #tpu.memory_space<vmem>>, vector<3x8x8xf32>,
    %c0_56 = arith.constant 0 : index
    %c0_57 = arith.constant 0 : index
    %c24_58 = arith.constant 24 : index
    %108 = vector.load %arg10[%c0_56, %c0_57, %c24_58] : memref<3x8x32xf32, #tpu.memory_space<vmem>>, vector<3x8x8xf32>
    tpu.vector_store %arg10[%c0_56, %c0_57, %c24_58], %104 {strides = array<i32>} : memref<3x8x32xf32, #tpu.memory_space<vmem>>, vector<3x8x8xf32>,
    return
  }
  func.func @transform_0(%arg0: i32, %arg1: i32) -> (i32, i32) {
    %c0_i32 = arith.constant 0 : i32
    %c0_i32_0 = arith.constant 0 : i32
    %c0_i32_1 = arith.constant 0 : i32
    return %c0_i32, %c0_i32_0 : i32, i32
  }
  func.func @transform_1(%arg0: i32, %arg1: i32) -> (i32, i32, i32) {
    %c0_i32 = arith.constant 0 : i32
    %c0_i32_0 = arith.constant 0 : i32
    return %arg0, %arg1, %c0_i32 : i32, i32, i32
  }
  func.func @transform_2(%arg0: i32, %arg1: i32) -> (i32, i32, i32) {
    %c0_i32 = arith.constant 0 : i32
    %c0_i32_0 = arith.constant 0 : i32
    %c0_i32_1 = arith.constant 0 : i32
    return %arg0, %c0_i32, %c0_i32_0 : i32, i32, i32
  }
  func.func @transform_3(%arg0: i32, %arg1: i32) -> (i32, i32, i32) {
    %c0_i32 = arith.constant 0 : i32
    %c0_i32_0 = arith.constant 0 : i32
    %c0_i32_1 = arith.constant 0 : i32
    return %arg0, %c0_i32, %c0_i32_0 : i32, i32, i32
  }
  func.func @transform_4(%arg0: i32, %arg1: i32) -> (i32, i32) {
    %c0_i32 = arith.constant 0 : i32
    %c0_i32_0 = arith.constant 0 : i32
    %c0_i32_1 = arith.constant 0 : i32
    return %c0_i32, %c0_i32_0 : i32, i32
  }
  func.func @transform_5(%arg0: i32, %arg1: i32) -> (i32, i32) {
    %c0_i32 = arith.constant 0 : i32
    %c0_i32_0 = arith.constant 0 : i32
    %c0_i32_1 = arith.constant 0 : i32
    return %c0_i32, %c0_i32_0 : i32, i32
  }
  func.func @transform_6(%arg0: i32, %arg1: i32) -> (i32, i32) {
    %c0_i32 = arith.constant 0 : i32
    %c0_i32_0 = arith.constant 0 : i32
    %c0_i32_1 = arith.constant 0 : i32
    return %c0_i32, %c0_i32_0 : i32, i32
  }
  func.func @transform_7(%arg0: i32, %arg1: i32) -> (i32, i32, i32) {
    %c0_i32 = arith.constant 0 : i32
    %c0_i32_0 = arith.constant 0 : i32
    return %arg0, %arg1, %c0_i32 : i32, i32, i32
  }
  func.func @transform_8(%arg0: i32, %arg1: i32) -> (i32, i32, i32) {
    %c0_i32 = arith.constant 0 : i32
    %c0_i32_0 = arith.constant 0 : i32
    return %arg0, %arg1, %c0_i32 : i32, i32, i32
  }
}

</mosaic_0001>

<llo_original>
// kernel: tpu_custom_call.1
$region0: #{tpu_custom_call.1}
  #allocation0 [shape = 'u32[]', space=smem, size = 0x4, offset = 0x4, fixed_abs, tag = 'smem constant byte address 0x4 - core index']
  #allocation1 [shape = 'u32[72,128]{1,0:T(1,128)}', space=vmem, size = 0x9000, scoped, tag = 'internal scratch']
  %s0 = inlined_call_operand.vmem [shape: s32[6,1], index: 0, kind: input, shape index: {}]
  %s1 = inlined_call_operand.hbm [shape: f32[6,8,16], index: 1, kind: input, shape index: {}]
  %s2 = inlined_call_operand.hbm [shape: f32[6,8,16], index: 2, kind: input, shape index: {}]
  %s3 = inlined_call_operand.hbm [shape: f32[6,8,16], index: 3, kind: input, shape index: {}]
  %s4 = inlined_call_operand.hbm [shape: f32[16,32], index: 4, kind: input, shape index: {}]
  %s5 = inlined_call_operand.hbm [shape: f32[16,32], index: 5, kind: input, shape index: {}]
  %s6 = inlined_call_operand.hbm [shape: f32[16,32], index: 6, kind: input, shape index: {}]
  %s7 = inlined_call_operand.hbm [shape: f32[6,8,32], index: 7, kind: output, shape index: {0}]
  %s8 = inlined_call_operand.hbm [shape: f32[6,8,32], index: 8, kind: output, shape index: {1}]
  %9 = xla_tuple %s7, %s8
  %s10 = sld [smem:[#allocation0]]
  $region93: #{tpu_custom_call.1} parent=0
    _
  %s12 = ssub.s32 1, %s10
  %s13 = scalar_select 0, %s12, %s10
  $region1: #{tpu_custom_call.1} parent=0
    #allocation2 [shape = 'u8[24576]{0}', space=vmem, size = 0x6000, scoped, tag = 'input window, operand 1']
    #allocation3 [shape = 's32[2]{0}', space=sflag, size = 0x8, scoped, tag = 'scoped memory for tpu_custom_call.1']
    #allocation4 [shape = 's32[2]{0}', space=sflag, size = 0x8, scoped, tag = 'scoped memory for tpu_custom_call.1']
    #allocation5 [shape = 'u8[24576]{0}', space=vmem, size = 0x6000, scoped, tag = 'input window, operand 2']
    #allocation6 [shape = 's32[2]{0}', space=sflag, size = 0x8, scoped, tag = 'scoped memory for tpu_custom_call.1']
    #allocation7 [shape = 'u8[24576]{0}', space=vmem, size = 0x6000, scoped, tag = 'input window, operand 3']
    #allocation8 [shape = 'u8[8192]{0}', space=vmem, size = 0x2000, scoped, tag = 'input window, operand 4, single buffered']
    #allocation9 [shape = 's32[1]{0}', space=sflag, size = 0x4, scoped, tag = 'scoped memory for tpu_custom_call.1']
    #allocation10 [shape = 'u8[8192]{0}', space=vmem, size = 0x2000, scoped, tag = 'input window, operand 5, single buffered']
    #allocation11 [shape = 'u8[8192]{0}', space=vmem, size = 0x2000, scoped, tag = 'input window, operand 6, single buffered']
    #allocation12 [shape = 's32[1]{0}', space=sflag, size = 0x4, scoped, tag = 'scoped memory for tpu_custom_call.1']
    #allocation13 [shape = 'u8[24576]{0}', space=vmem, size = 0x6000, scoped, tag = 'output window, operand 0']
    #allocation14 [shape = 'u8[24576]{0}', space=vmem, size = 0x6000, scoped, tag = 'output window, operand 1']
    #allocation15 [shape = 's32[2]{0}', space=sflag, size = 0x8, scoped, tag = 'scoped memory for tpu_custom_call.1']
    %14 = vsyncpa [#allocation3], 0
    %s15 = scalar_lea.sflag [#allocation3], 1
    %16 = vsyncpa %s15, 0
    %17 = vsyncpa [#allocation6], 0
    %s18 = scalar_lea.sflag [#allocation6], 1
    %19 = vsyncpa %s18, 0
    %20 = vsyncpa [#allocation9], 0
    %21 = vsyncpa [#allocation12], 0
    %22 = vsyncpa [#allocation4], 0
    %s23 = scalar_lea.sflag [#allocation4], 1
    %24 = vsyncpa %s23, 0
    %25 = vsyncpa [#allocation15], 0
    %s26 = scalar_lea.sflag [#allocation15], 1
    %27 = vsyncpa %s26, 0
    loop: start=0, step=1, limit=4
    $region2: #{tpu_custom_call.1} parent=1 // loop_pre_header
      _
    $region3: #{tpu_custom_call.1} parent=1 // loop_header
      %s29 = sphi 0, %s33
      %p30 = scmp.ge.s32.totalorder %s29, 4
      %s36 = sphi 0, %s48
      %s37 = sphi 0, %s44
      %s38 = sphi 0, %s36
      %s39 = sphi 0, %s37
      %s40 = sphi 0, %s38
      %s41 = sphi 0, %s39
      %s49 = sphi 0, %s49
      %s51 = sphi 0, %s49
      %s52 = sphi 0, %s51
      %s66 = sphi 0, %s52
      %s74 = sphi 0, %s76
      %s77 = sphi 0, %s74
      %s78 = sphi 0, %s77
      %s94 = sphi 0, %s78
      %s100 = sphi 0, %s102
      %s103 = sphi 0, %s100
      %s104 = sphi 0, %s103
      %s120 = sphi 0, %s104
      %s126 = sphi 0, %s128
      %s129 = sphi 0, %s126
      %s130 = sphi 0, %s129
      %s146 = sphi 0, %s130
      %s150 = sphi 0, %s150
      %s152 = sphi 0, %s150
      %s153 = sphi 0, %s152
      %s167 = sphi 0, %s153
      %s171 = sphi 0, %s171
      %s173 = sphi 0, %s171
      %s174 = sphi 0, %s173
      %s188 = sphi 0, %s174
      %s192 = sphi 0, %s192
      %s194 = sphi 0, %s192
      %s195 = sphi 0, %s194
      %s209 = sphi 0, %s195
      %s217 = sphi 0, %s219
      %s220 = sphi 0, %s217
      %s221 = sphi 0, %s220
      %s237 = sphi 0, %s221
      %s245 = sphi 0, %s247
      %s248 = sphi 0, %s245
      %s249 = sphi 0, %s248
      %s265 = sphi 0, %s249
    $region4: #{tpu_custom_call.1} parent=1 // loop_header_branch
      %32 = sbr.rel (%p30) target = $region8
    $region5: #{tpu_custom_call.1} parent=1 // loop_body
      %s34 = ssub.s32 %s29, 1
      %s35 = ssub.s32 %s29, 2
      %s42 = sadd.s32 1, %s37
      %p43 = scmp.ge.s32.totalorder %s42, 1
      %s44 = scalar_select %p43, 0, %s42
      %s45 = sadd.s32 1, %s36
      %s46 = scalar_select %p43, %s45, %s36
      %p47 = scmp.ge.s32.totalorder %s46, 2
      %s48 = scalar_select %p47, 0, %s46
      %s50 = sadd.s32 %s49, 1
      %p53 = scmp.eq.s32.totalorder %s29, 1
      %p54 = scmp.ne.s32.totalorder %s49, %s51
      %p55 = scmp.eq.s32.totalorder %s29, 0
      %p56 = por %p54, %p55
      %p57 = scmp.ne.s32.totalorder %s49, %s51
      %p58 = scmp.eq.s32.totalorder %s34, 1
      %p59 = por %p57, %p58
      %p60 = scmp.ne.s32.totalorder %s51, %s52
      %p61 = scmp.eq.s32.totalorder %s34, 0
      %p62 = por %p60, %p61
      %p63 = scmp.ne.s32.totalorder %s51, %s52
      %p64 = scmp.eq.s32.totalorder %s35, 1
      %p65 = por %p63, %p64
      %p67 = scmp.ne.s32.totalorder %s52, %s66
      %p68 = scmp.eq.s32.totalorder %s35, 0
      %p69 = por %p67, %p68
      %s70 = ssub.s32 %s36, %s48
      %s71 = ssub.s32 %s37, %s44
      %s72 = sor.u32 %s70, %s71
      %p73 = scmp.eq.s32.totalorder %s72, 0
      %s75 = sadd.s32 %s74, 1
      %s76 = scalar_select %p73, %s74, %s75
      %p79 = pneg %p73
      %p80 = scmp.eq.s32.totalorder %s29, 1
      %p81 = por %p79, %p80
      %p82 = scmp.ne.s32.totalorder %s74, %s77
      %p83 = scmp.eq.s32.totalorder %s29, 0
      %p84 = por %p82, %p83
      %p85 = scmp.ne.s32.totalorder %s74, %s77
      %p86 = scmp.eq.s32.totalorder %s34, 1
      %p87 = por %p85, %p86
      %p88 = scmp.ne.s32.totalorder %s77, %s78
      %p89 = scmp.eq.s32.totalorder %s34, 0
      %p90 = por %p88, %p89
      %p91 = scmp.ne.s32.totalorder %s77, %s78
      %p92 = scmp.eq.s32.totalorder %s35, 1
      %p93 = por %p91, %p92
      %p95 = scmp.ne.s32.totalorder %s78, %s94
      %p96 = scmp.eq.s32.totalorder %s35, 0
      %p97 = por %p95, %p96
      %s98 = ssub.s32 %s36, %s48
      %p99 = scmp.eq.s32.totalorder %s98, 0
      %s101 = sadd.s32 %s100, 1
      %s102 = scalar_select %p99, %s100, %s101
      %p105 = pneg %p99
      %p106 = scmp.eq.s32.totalorder %s29, 1
      %p107 = por %p105, %p106
      %p108 = scmp.ne.s32.totalorder %s100, %s103
      %p109 = scmp.eq.s32.totalorder %s29, 0
      %p110 = por %p108, %p109
      %p111 = scmp.ne.s32.totalorder %s100, %s103
      %p112 = scmp.eq.s32.totalorder %s34, 1
      %p113 = por %p111, %p112
      %p114 = scmp.ne.s32.totalorder %s103, %s104
      %p115 = scmp.eq.s32.totalorder %s34, 0
      %p116 = por %p114, %p115
      %p117 = scmp.ne.s32.totalorder %s103, %s104
      %p118 = scmp.eq.s32.totalorder %s35, 1
      %p119 = por %p117, %p118
      %p121 = scmp.ne.s32.totalorder %s104, %s120
      %p122 = scmp.eq.s32.totalorder %s35, 0
      %p123 = por %p121, %p122
      %s124 = ssub.s32 %s36, %s48
      %p125 = scmp.eq.s32.totalorder %s124, 0
      %s127 = sadd.s32 %s126, 1
      %s128 = scalar_select %p125, %s126, %s127
      %p131 = pneg %p125
      %p132 = scmp.eq.s32.totalorder %s29, 1
      %p133 = por %p131, %p132
      %p134 = scmp.ne.s32.totalorder %s126, %s129
      %p135 = scmp.eq.s32.totalorder %s29, 0
      %p136 = por %p134, %p135
      %p137 = scmp.ne.s32.totalorder %s126, %s129
      %p138 = scmp.eq.s32.totalorder %s34, 1
      %p139 = por %p137, %p138
      %p140 = scmp.ne.s32.totalorder %s129, %s130
      %p141 = scmp.eq.s32.totalorder %s34, 0
      %p142 = por %p140, %p141
      %p143 = scmp.ne.s32.totalorder %s129, %s130
      %p144 = scmp.eq.s32.totalorder %s35, 1
      %p145 = por %p143, %p144
      %p147 = scmp.ne.s32.totalorder %s130, %s146
      %p148 = scmp.eq.s32.totalorder %s35, 0
      %p149 = por %p147, %p148
      %s151 = sadd.s32 %s150, 1
      %p154 = scmp.eq.s32.totalorder %s29, 1
      %p155 = scmp.ne.s32.totalorder %s150, %s152
      %p156 = scmp.eq.s32.totalorder %s29, 0
      %p157 = por %p155, %p156
      %p158 = scmp.ne.s32.totalorder %s150, %s152
      %p159 = scmp.eq.s32.totalorder %s34, 1
      %p160 = por %p158, %p159
      %p161 = scmp.ne.s32.totalorder %s152, %s153
      %p162 = scmp.eq.s32.totalorder %s34, 0
      %p163 = por %p161, %p162
      %p164 = scmp.ne.s32.totalorder %s152, %s153
      %p165 = scmp.eq.s32.totalorder %s35, 1
      %p166 = por %p164, %p165
      %p168 = scmp.ne.s32.totalorder %s153, %s167
      %p169 = scmp.eq.s32.totalorder %s35, 0
      %p170 = por %p168, %p169
      %s172 = sadd.s32 %s171, 1
      %p175 = scmp.eq.s32.totalorder %s29, 1
      %p176 = scmp.ne.s32.totalorder %s171, %s173
      %p177 = scmp.eq.s32.totalorder %s29, 0
      %p178 = por %p176, %p177
      %p179 = scmp.ne.s32.totalorder %s171, %s173
      %p180 = scmp.eq.s32.totalorder %s34, 1
      %p181 = por %p179, %p180
      %p182 = scmp.ne.s32.totalorder %s173, %s174
      %p183 = scmp.eq.s32.totalorder %s34, 0
      %p184 = por %p182, %p183
      %p185 = scmp.ne.s32.totalorder %s173, %s174
      %p186 = scmp.eq.s32.totalorder %s35, 1
      %p187 = por %p185, %p186
      %p189 = scmp.ne.s32.totalorder %s174, %s188
      %p190 = scmp.eq.s32.totalorder %s35, 0
      %p191 = por %p189, %p190
      %s193 = sadd.s32 %s192, 1
      %p196 = scmp.eq.s32.totalorder %s29, 1
      %p197 = scmp.ne.s32.totalorder %s192, %s194
      %p198 = scmp.eq.s32.totalorder %s29, 0
      %p199 = por %p197, %p198
      %p200 = scmp.ne.s32.totalorder %s192, %s194
      %p201 = scmp.eq.s32.totalorder %s34, 1
      %p202 = por %p200, %p201
      %p203 = scmp.ne.s32.totalorder %s194, %s195
      %p204 = scmp.eq.s32.totalorder %s34, 0
      %p205 = por %p203, %p204
      %p206 = scmp.ne.s32.totalorder %s194, %s195
      %p207 = scmp.eq.s32.totalorder %s35, 1
      %p208 = por %p206, %p207
      %p210 = scmp.ne.s32.totalorder %s195, %s209
      %p211 = scmp.eq.s32.totalorder %s35, 0
      %p212 = por %p210, %p211
      %s213 = ssub.s32 %s36, %s48
      %s214 = ssub.s32 %s37, %s44
      %s215 = sor.u32 %s213, %s214
      %p216 = scmp.eq.s32.totalorder %s215, 0
      %s218 = sadd.s32 %s217, 1
      %s219 = scalar_select %p216, %s217, %s218
      %p222 = pneg %p216
      %p223 = scmp.eq.s32.totalorder %s29, 1
      %p224 = por %p222, %p223
      %p225 = scmp.ne.s32.totalorder %s217, %s220
      %p226 = scmp.eq.s32.totalorder %s29, 0
      %p227 = por %p225, %p226
      %p228 = scmp.ne.s32.totalorder %s217, %s220
      %p229 = scmp.eq.s32.totalorder %s34, 1
      %p230 = por %p228, %p229
      %p231 = scmp.ne.s32.totalorder %s220, %s221
      %p232 = scmp.eq.s32.totalorder %s34, 0
      %p233 = por %p231, %p232
      %p234 = scmp.ne.s32.totalorder %s220, %s221
      %p235 = scmp.eq.s32.totalorder %s35, 1
      %p236 = por %p234, %p235
      %p238 = scmp.ne.s32.totalorder %s221, %s237
      %p239 = scmp.eq.s32.totalorder %s35, 0
      %p240 = por %p238, %p239
      %s241 = ssub.s32 %s36, %s48
      %s242 = ssub.s32 %s37, %s44
      %s243 = sor.u32 %s241, %s242
      %p244 = scmp.eq.s32.totalorder %s243, 0
      %s246 = sadd.s32 %s245, 1
      %s247 = scalar_select %p244, %s245, %s246
      %p250 = pneg %p244
      %p251 = scmp.eq.s32.totalorder %s29, 1
      %p252 = por %p250, %p251
      %p253 = scmp.ne.s32.totalorder %s245, %s248
      %p254 = scmp.eq.s32.totalorder %s29, 0
      %p255 = por %p253, %p254
      %p256 = scmp.ne.s32.totalorder %s245, %s248
      %p257 = scmp.eq.s32.totalorder %s34, 1
      %p258 = por %p256, %p257
      %p259 = scmp.ne.s32.totalorder %s248, %s249
      %p260 = scmp.eq.s32.totalorder %s34, 0
      %p261 = por %p259, %p260
      %p262 = scmp.ne.s32.totalorder %s248, %s249
      %p263 = scmp.eq.s32.totalorder %s35, 1
      %p264 = por %p262, %p263
      %p266 = scmp.ne.s32.totalorder %s249, %s265
      %p267 = scmp.eq.s32.totalorder %s35, 0
      %p268 = por %p266, %p267
      %p269 = scmp.le.s32.totalorder 1, %s29
      %p270 = scmp.lt.s32.totalorder %s29, 3
      %p271 = pnand %p269, %p270
      %p272 = pneg %p271
      // Predicated region
      $region9: #{tpu_custom_call.1} parent=5 // pred_check
        _
      $region10: #{tpu_custom_call.1} parent=5 // pred_check_branch
        %274 = sbr.rel (%p271) target = $region12
      $region11: #{tpu_custom_call.1} parent=5 // pred_region
        %s275 = ssub.s32 %s29, 1
        // Predicated region
        $region13: #{tpu_custom_call.1} parent=11 // pred_check
          %p276 = pneg %p62
        $region14: #{tpu_custom_call.1} parent=11 // pred_check_branch
          %278 = sbr.rel (%p276) target = $region16
        $region15: #{tpu_custom_call.1} parent=11 // pred_region
          _
        $region16: #{tpu_custom_call.1} parent=11 // pred_fallthru
          _
        // Predicated region
        $region17: #{tpu_custom_call.1} parent=11 // pred_check
          %p279 = pneg %p163
        $region18: #{tpu_custom_call.1} parent=11 // pred_check_branch
          %281 = sbr.rel (%p279) target = $region20
        $region19: #{tpu_custom_call.1} parent=11 // pred_region
          %283 = vsyncadd [#allocation9], 0
          %s284 = sshll.u32 %s4, 4
          %s285 = int_to_ptr.hbm [resolvable:$true] %s284
          %s286 = sshll.u32 [#allocation8], 4
          %s287 = int_to_ptr.vmem [resolvable:$true] %s286
          %292 = dma.hbm_to_vmem [thread:$0]  %s285, 256, %s287, [#allocation9], 128, 128, 8
        $region20: #{tpu_custom_call.1} parent=11 // pred_fallthru
          _
        // Predicated region
        $region21: #{tpu_custom_call.1} parent=11 // pred_check
          %p293 = pneg %p184
        $region22: #{tpu_custom_call.1} parent=11 // pred_check_branch
          %295 = sbr.rel (%p293) target = $region24
        $region23: #{tpu_custom_call.1} parent=11 // pred_region
          %297 = vsyncadd [#allocation9], 0
          %s298 = sshll.u32 %s5, 4
          %s299 = int_to_ptr.hbm [resolvable:$true] %s298
          %s300 = sshll.u32 [#allocation10], 4
          %s301 = int_to_ptr.vmem [resolvable:$true] %s300
          %306 = dma.hbm_to_vmem [thread:$0]  %s299, 256, %s301, [#allocation9], 128, 128, 8
        $region24: #{tpu_custom_call.1} parent=11 // pred_fallthru
          _
        // Predicated region
        $region25: #{tpu_custom_call.1} parent=11 // pred_check
          %p307 = pneg %p205
        $region26: #{tpu_custom_call.1} parent=11 // pred_check_branch
          %309 = sbr.rel (%p307) target = $region28
        $region27: #{tpu_custom_call.1} parent=11 // pred_region
          %311 = vsyncadd [#allocation12], 0
          %s312 = sshll.u32 %s6, 4
          %s313 = int_to_ptr.hbm [resolvable:$true] %s312
          %s314 = sshll.u32 [#allocation11], 4
          %s315 = int_to_ptr.vmem [resolvable:$true] %s314
          %320 = dma.hbm_to_vmem [thread:$0]  %s313, 256, %s315, [#allocation12], 128, 128, 8
        $region28: #{tpu_custom_call.1} parent=11 // pred_fallthru
          _
      $region12: #{tpu_custom_call.1} parent=5 // pred_fallthru
        _
      %p321 = scmp.lt.s32.totalorder %s29, 2
      // Predicated region
      $region29: #{tpu_custom_call.1} parent=5 // pred_check
        %p322 = pneg %p321
      $region30: #{tpu_custom_call.1} parent=5 // pred_check_branch
        %324 = sbr.rel (%p322) target = $region32
      $region31: #{tpu_custom_call.1} parent=5 // pred_region
        // Predicated region
        $region33: #{tpu_custom_call.1} parent=31 // pred_check
          %p325 = pneg %p84
        $region34: #{tpu_custom_call.1} parent=31 // pred_check_branch
          %327 = sbr.rel (%p325) target = $region36
        $region35: #{tpu_custom_call.1} parent=31 // pred_region
          %s328 = sand.u32 %s74, 1
          %s329 = scalar_lea.sflag [#allocation3], %s328
          %s330 = sand.u32 %s74, 1
          %s331 = smul.addr %s330, 24
          %s332 = scalar_lea.vmem [#allocation2], %s331
          %s333 = smul.u32 3, %s36
          %335 = vsyncadd %s329, 0
          %s336 = sadd.s32 %s37, %s333
          %s337 = smul.addr %s336, 8
          %s338 = scalar_lea.hbm %s1, %s337
          %s339 = sshll.u32 %s338, 4
          %s340 = int_to_ptr.hbm [resolvable:$true] %s339
          %s341 = sshll.u32 %s332, 4
          %s342 = int_to_ptr.vmem [resolvable:$true] %s341
          %347 = dma.hbm_to_vmem [thread:$0]  %s340, 384, %s342, %s329, 128, 128, 8
        $region36: #{tpu_custom_call.1} parent=31 // pred_fallthru
          _
        // Predicated region
        $region37: #{tpu_custom_call.1} parent=31 // pred_check
          %p348 = pneg %p110
        $region38: #{tpu_custom_call.1} parent=31 // pred_check_branch
          %350 = sbr.rel (%p348) target = $region40
        $region39: #{tpu_custom_call.1} parent=31 // pred_region
          %s351 = sand.u32 %s29, 1
          %s352 = scalar_lea.sflag [#allocation6], %s351
          %s353 = sand.u32 %s100, 1
          %s354 = smul.addr %s353, 24
          %s355 = scalar_lea.vmem [#allocation5], %s354
          %s356 = smul.u32 3, %s36
          %358 = vsyncadd %s352, 0
          %s359 = smul.addr %s356, 8
          %s360 = scalar_lea.hbm %s2, %s359
          %s361 = sshll.u32 %s360, 4
          %s362 = int_to_ptr.hbm [resolvable:$true] %s361
          %s363 = sshll.u32 %s355, 4
          %s364 = int_to_ptr.vmem [resolvable:$true] %s363
          %369 = dma.hbm_to_vmem [thread:$0]  %s362, 384, %s364, %s352, 128, 128, 8
        $region40: #{tpu_custom_call.1} parent=31 // pred_fallthru
          _
        // Predicated region
        $region41: #{tpu_custom_call.1} parent=31 // pred_check
          %p370 = pneg %p136
        $region42: #{tpu_custom_call.1} parent=31 // pred_check_branch
          %372 = sbr.rel (%p370) target = $region44
        $region43: #{tpu_custom_call.1} parent=31 // pred_region
          %s373 = sand.u32 %s29, 1
          %s374 = scalar_lea.sflag [#allocation6], %s373
          %s375 = sand.u32 %s126, 1
          %s376 = smul.addr %s375, 24
          %s377 = scalar_lea.vmem [#allocation7], %s376
          %s378 = smul.u32 3, %s36
          %380 = vsyncadd %s374, 0
          %s381 = smul.addr %s378, 8
          %s382 = scalar_lea.hbm %s3, %s381
          %s383 = sshll.u32 %s382, 4
          %s384 = int_to_ptr.hbm [resolvable:$true] %s383
          %s385 = sshll.u32 %s377, 4
          %s386 = int_to_ptr.vmem [resolvable:$true] %s385
          %391 = dma.hbm_to_vmem [thread:$0]  %s384, 384, %s386, %s374, 128, 128, 8
        $region44: #{tpu_custom_call.1} parent=31 // pred_fallthru
          _
      $region32: #{tpu_custom_call.1} parent=5 // pred_fallthru
        _
      %p392 = scmp.le.s32.totalorder 1, %s29
      %p393 = scmp.lt.s32.totalorder %s29, 3
      %p394 = pnand %p392, %p393
      %p395 = pneg %p394
      // Predicated region
      $region45: #{tpu_custom_call.1} parent=5 // pred_check
        _
      $region46: #{tpu_custom_call.1} parent=5 // pred_check_branch
        %397 = sbr.rel (%p394) target = $region48
      $region47: #{tpu_custom_call.1} parent=5 // pred_region
        %s398 = ssub.s32 %s29, 1
        %s399 = sand.u32 %s77, 1
        %s400 = scalar_lea.sflag [#allocation3], %s399
        %s401 = sand.u32 %s77, 1
        %s402 = smul.addr %s401, 24
        %s403 = scalar_lea.vmem [#allocation2], %s402
        // Predicated region
        $region49: #{tpu_custom_call.1} parent=47 // pred_check
          %p404 = pneg %p90
        $region50: #{tpu_custom_call.1} parent=47 // pred_check_branch
          %406 = sbr.rel (%p404) target = $region52
        $region51: #{tpu_custom_call.1} parent=47 // pred_region
          %408 = dma.done %s400, 384
        $region52: #{tpu_custom_call.1} parent=47 // pred_fallthru
          _
        %s409 = sand.u32 %s34, 1
        %s410 = scalar_lea.sflag [#allocation6], %s409
        %s411 = sand.u32 %s103, 1
        %s412 = smul.addr %s411, 24
        %s413 = scalar_lea.vmem [#allocation5], %s412
        // Predicated region
        $region53: #{tpu_custom_call.1} parent=47 // pred_check
          %p414 = pneg %p116
        $region54: #{tpu_custom_call.1} parent=47 // pred_check_branch
          %416 = sbr.rel (%p414) target = $region56
        $region55: #{tpu_custom_call.1} parent=47 // pred_region
          %418 = dma.done %s410, 384
        $region56: #{tpu_custom_call.1} parent=47 // pred_fallthru
          _
        %s419 = sand.u32 %s34, 1
        %s420 = scalar_lea.sflag [#allocation6], %s419
        %s421 = sand.u32 %s129, 1
        %s422 = smul.addr %s421, 24
        %s423 = scalar_lea.vmem [#allocation7], %s422
        // Predicated region
        $region57: #{tpu_custom_call.1} parent=47 // pred_check
          %p424 = pneg %p142
        $region58: #{tpu_custom_call.1} parent=47 // pred_check_branch
          %426 = sbr.rel (%p424) target = $region60
        $region59: #{tpu_custom_call.1} parent=47 // pred_region
          %428 = dma.done %s420, 384
        $region60: #{tpu_custom_call.1} parent=47 // pred_fallthru
          _
        // Predicated region
        $region61: #{tpu_custom_call.1} parent=47 // pred_check
          %p429 = pneg %p163
        $region62: #{tpu_custom_call.1} parent=47 // pred_check_branch
          %431 = sbr.rel (%p429) target = $region64
        $region63: #{tpu_custom_call.1} parent=47 // pred_region
          %433 = dma.done [#allocation9], 256
        $region64: #{tpu_custom_call.1} parent=47 // pred_fallthru
          _
        // Predicated region
        $region65: #{tpu_custom_call.1} parent=47 // pred_check
          %p434 = pneg %p184
        $region66: #{tpu_custom_call.1} parent=47 // pred_check_branch
          %436 = sbr.rel (%p434) target = $region68
        $region67: #{tpu_custom_call.1} parent=47 // pred_region
          %438 = dma.done [#allocation9], 256
        $region68: #{tpu_custom_call.1} parent=47 // pred_fallthru
          _
        // Predicated region
        $region69: #{tpu_custom_call.1} parent=47 // pred_check
          %p439 = pneg %p205
        $region70: #{tpu_custom_call.1} parent=47 // pred_check_branch
          %441 = sbr.rel (%p439) target = $region72
        $region71: #{tpu_custom_call.1} parent=47 // pred_region
          %443 = dma.done [#allocation12], 256
        $region72: #{tpu_custom_call.1} parent=47 // pred_fallthru
          _
        %p444 = pneg %p62
        %p445 = pneg %p59
        %s446 = sand.u32 %s77, 1
        %s447 = scalar_lea.sflag [#allocation3], %s446
        %s448 = sand.u32 %s77, 1
        %s449 = smul.addr %s448, 24
        %s450 = scalar_lea.vmem [#allocation2], %s449
        %p451 = pneg %p90
        %p452 = pneg %p87
        %s453 = sand.u32 %s34, 1
        %s454 = scalar_lea.sflag [#allocation6], %s453
        %s455 = sand.u32 %s103, 1
        %s456 = smul.addr %s455, 24
        %s457 = scalar_lea.vmem [#allocation5], %s456
        %p458 = pneg %p116
        %p459 = pneg %p113
        %s460 = sand.u32 %s34, 1
        %s461 = scalar_lea.sflag [#allocation6], %s460
        %s462 = sand.u32 %s129, 1
        %s463 = smul.addr %s462, 24
        %s464 = scalar_lea.vmem [#allocation7], %s463
        %p465 = pneg %p142
        %p466 = pneg %p139
        %p467 = pneg %p163
        %p468 = pneg %p160
        %p469 = pneg %p184
        %p470 = pneg %p181
        %p471 = pneg %p205
        %p472 = pneg %p202
        %p473 = pneg %p233
        %p474 = pneg %p230
        %s475 = sand.u32 %s220, 1
        %s476 = scalar_lea.sflag [#allocation4], %s475
        %s477 = sand.u32 %s220, 1
        %s478 = smul.addr %s477, 24
        %s479 = scalar_lea.vmem [#allocation13], %s478
        %p480 = pneg %p261
        %p481 = pneg %p258
        %s482 = sand.u32 %s248, 1
        %s483 = scalar_lea.sflag [#allocation15], %s482
        %s484 = sand.u32 %s248, 1
        %s485 = smul.addr %s484, 24
        %s486 = scalar_lea.vmem [#allocation14], %s485
        %s487 = smul.u32 3, %s38
        %s488 = smul.u32 3, %s38
        %s489 = smul.u32 3, %s38
        %s490 = smul.u32 3, %s38
        %s491 = smul.u32 3, %s38
        %v492 = vld [vmem:[%s403] sm:$0xff]
        %v493 = vld [vmem:[%s403 + $0x8] sm:$0xff]
        %v494 = vld [vmem:[%s403 + $0x10] sm:$0xff]
        %v495 = vld [vmem:[%s413] sm:$0xff]
        %v496 = vld [vmem:[%s413 + $0x8] sm:$0xff]
        %v497 = vld [vmem:[%s413 + $0x10] sm:$0xff]
        %v498 = vld [vmem:[%s423] sm:$0xff]
        %v499 = vld [vmem:[%s423 + $0x8] sm:$0xff]
        %v500 = vld [vmem:[%s423 + $0x10] sm:$0xff]
        %v501 = vld [vmem:[#allocation8] sm:$0xff]
        %v502 = vld [vmem:[#allocation8 + $0x8] sm:$0xff]
        %vm503 = vcmask 130048
        %v505 = vsel %vm503, %v492, 0
        %v508 = vsel %vm503, %v493, 0
        %v511 = vsel %vm503, %v494, 0
        %513 = vmatpush.msra.mxu0 0.0
        %514 = vmatpush.msra.mxu0 0.0
        %515 = vmatpush.msra.mxu0 0.0
        %516 = vmatpush.msra.mxu0 0.0
        %517 = vmatpush.msra.mxu0 0.0
        %518 = vmatpush.msra.mxu0 0.0
        %519 = vmatpush.msra.mxu0 0.0
        %520 = vmatpush.msra.mxu0 0.0
        %521 = vmatpush.msra.mxu0 0.0
        %522 = vmatpush.msra.mxu0 0.0
        %523 = vmatpush.msra.mxu0 0.0
        %524 = vmatpush.msra.mxu0 0.0
        %525 = vmatpush.msra.mxu0 0.0
        %526 = vmatpush.msra.mxu0 0.0
        %527 = vmatpush.msra.mxu0 %v502
        %528 = vmatpush.msra.mxu0 %v501
        %529 = vmatmul.f32.gmra.mxu0 %v505
        %v530 = vpop.f32.mrf.mxu0
        %v531 = vadd.f32 0.0, %v530
        %532 = vmatmul.f32.gmra.mxu0 %v508
        %v533 = vpop.f32.mrf.mxu0
        %v534 = vadd.f32 0.0, %v533
        %535 = vmatmul.f32.gmra.mxu0 %v511
        %v536 = vpop.f32.mrf.mxu0
        %v537 = vadd.f32 0.0, %v536
        %538 = vdwg.mxu0
        %v539 = vmul.f32 %v531, 0.35355338
        %v540 = vmul.f32 %v534, 0.35355338
        %v541 = vmul.f32 %v537, 0.35355338
        %v542 = vld [vmem:[#allocation10] sm:$0xff]
        %v543 = vld [vmem:[#allocation10 + $0x8] sm:$0xff]
        %v545 = vsel %vm503, %v495, 0
        %v548 = vsel %vm503, %v496, 0
        %v551 = vsel %vm503, %v497, 0
        %553 = vmatpush.msra.mxu0 0.0
        %554 = vmatpush.msra.mxu0 0.0
        %555 = vmatpush.msra.mxu0 0.0
        %556 = vmatpush.msra.mxu0 0.0
        %557 = vmatpush.msra.mxu0 0.0
        %558 = vmatpush.msra.mxu0 0.0
        %559 = vmatpush.msra.mxu0 0.0
        %560 = vmatpush.msra.mxu0 0.0
        %561 = vmatpush.msra.mxu0 0.0
        %562 = vmatpush.msra.mxu0 0.0
        %563 = vmatpush.msra.mxu0 0.0
        %564 = vmatpush.msra.mxu0 0.0
        %565 = vmatpush.msra.mxu0 0.0
        %566 = vmatpush.msra.mxu0 0.0
        %567 = vmatpush.msra.mxu0 %v543
        %568 = vmatpush.msra.mxu0 %v542
        %569 = vmatmul.f32.gmra.mxu0 %v545
        %v570 = vpop.f32.mrf.mxu0
        %v571 = vadd.f32 0.0, %v570
        %572 = vmatmul.f32.gmra.mxu0 %v548
        %v573 = vpop.f32.mrf.mxu0
        %v574 = vadd.f32 0.0, %v573
        %575 = vmatmul.f32.gmra.mxu0 %v551
        %v576 = vpop.f32.mrf.mxu0
        %v577 = vadd.f32 0.0, %v576
        %578 = vdwg.mxu0
        %v579 = vld [vmem:[#allocation11] sm:$0xff]
        %v580 = vld [vmem:[#allocation11 + $0x8] sm:$0xff]
        %v582 = vsel %vm503, %v498, 0
        %v585 = vsel %vm503, %v499, 0
        %v588 = vsel %vm503, %v500, 0
        %590 = vmatpush.msra.mxu0 0.0
        %591 = vmatpush.msra.mxu0 0.0
        %592 = vmatpush.msra.mxu0 0.0
        %593 = vmatpush.msra.mxu0 0.0
        %594 = vmatpush.msra.mxu0 0.0
        %595 = vmatpush.msra.mxu0 0.0
        %596 = vmatpush.msra.mxu0 0.0
        %597 = vmatpush.msra.mxu0 0.0
        %598 = vmatpush.msra.mxu0 0.0
        %599 = vmatpush.msra.mxu0 0.0
        %600 = vmatpush.msra.mxu0 0.0
        %601 = vmatpush.msra.mxu0 0.0
        %602 = vmatpush.msra.mxu0 0.0
        %603 = vmatpush.msra.mxu0 0.0
        %604 = vmatpush.msra.mxu0 %v580
        %605 = vmatpush.msra.mxu0 %v579
        %606 = vmatmul.f32.gmra.mxu0 %v582
        %v607 = vpop.f32.mrf.mxu0
        %v608 = vadd.f32 0.0, %v607
        %609 = vmatmul.f32.gmra.mxu0 %v585
        %v610 = vpop.f32.mrf.mxu0
        %v611 = vadd.f32 0.0, %v610
        %612 = vmatmul.f32.gmra.mxu0 %v588
        %v613 = vpop.f32.mrf.mxu0
        %v614 = vadd.f32 0.0, %v613
        %615 = vdwg.mxu0
        %s616 = smul.u32 %s38, 3
        %s617 = scalar_lea.vmem %s0, %s616
        %v618 = vld [vmem:[%s617] sm:$0x7]
        %v619 = vlaneseq
        %v620 = vand.u32 %v619, 127
        %v621 = vrot.slane %v618, 1
        %v622 = vrot.slane %v618, 2
        %623 = vset.pattern.permute.xlu0 0
        %624 = vperm.xlu0 %623, %v618
        %v625 = vpop.permute.xlu0 %624
        %v626 = vperm.slane %v625, 0
        %627 = vset.pattern.permute.xlu0 0
        %628 = vperm.xlu0 %627, %v621
        %v629 = vpop.permute.xlu0 %628
        %v630 = vperm.slane %v629, 0
        %631 = vset.pattern.permute.xlu0 0
        %632 = vperm.xlu0 %631, %v622
        %v633 = vpop.permute.xlu0 %632
        %v634 = vperm.slane %v633, 0
        %vm635 = vcmp.lt.s32.totalorder %v620, %v626
        %vm636 = vcmp.lt.s32.totalorder %v620, %v630
        %vm637 = vcmp.lt.s32.totalorder %v620, %v634
        %vm638 = vcmask 64512
        %v640 = vsel %vm638, %v539, 0
        %v643 = vsel %vm638, %v571, 0
        %645 = vmatpush.xpose.msra.mxu0 0.0
        %646 = vmatpush.xpose.msra.mxu0 0.0
        %647 = vmatpush.xpose.msra.mxu0 0.0
        %648 = vmatpush.xpose.msra.mxu0 0.0
        %649 = vmatpush.xpose.msra.mxu0 0.0
        %650 = vmatpush.xpose.msra.mxu0 0.0
        %651 = vmatpush.xpose.msra.mxu0 0.0
        %652 = vmatpush.xpose.msra.mxu0 0.0
        %653 = vmatpush.xpose.msra.mxu0 0.0
        %654 = vmatpush.xpose.msra.mxu0 0.0
        %655 = vmatpush.xpose.msra.mxu0 0.0
        %656 = vmatpush.xpose.msra.mxu0 0.0
        %657 = vmatpush.xpose.msra.mxu0 0.0
        %658 = vmatpush.xpose.msra.mxu0 0.0
        %659 = vmatpush.xpose.msra.mxu0 0.0
        %660 = vmatpush.xpose.msra.mxu0 %v643
        %661 = vmatmul.f32.gmra.mxu0 %v640
        %v662 = vpop.f32.mrf.mxu0
        %v663 = vadd.f32 0.0, %v662
        %664 = vdwg.mxu0
        %v666 = vsel %vm638, %v540, 0
        %v669 = vsel %vm638, %v574, 0
        %671 = vmatpush.xpose.msra.mxu0 0.0
        %672 = vmatpush.xpose.msra.mxu0 0.0
        %673 = vmatpush.xpose.msra.mxu0 0.0
        %674 = vmatpush.xpose.msra.mxu0 0.0
        %675 = vmatpush.xpose.msra.mxu0 0.0
        %676 = vmatpush.xpose.msra.mxu0 0.0
        %677 = vmatpush.xpose.msra.mxu0 0.0
        %678 = vmatpush.xpose.msra.mxu0 0.0
        %679 = vmatpush.xpose.msra.mxu0 0.0
        %680 = vmatpush.xpose.msra.mxu0 0.0
        %681 = vmatpush.xpose.msra.mxu0 0.0
        %682 = vmatpush.xpose.msra.mxu0 0.0
        %683 = vmatpush.xpose.msra.mxu0 0.0
        %684 = vmatpush.xpose.msra.mxu0 0.0
        %685 = vmatpush.xpose.msra.mxu0 0.0
        %686 = vmatpush.xpose.msra.mxu0 %v669
        %687 = vmatmul.f32.gmra.mxu0 %v666
        %v688 = vpop.f32.mrf.mxu0
        %v689 = vadd.f32 0.0, %v688
        %690 = vdwg.mxu0
        %v692 = vsel %vm638, %v541, 0
        %v695 = vsel %vm638, %v577, 0
        %697 = vmatpush.xpose.msra.mxu0 0.0
        %698 = vmatpush.xpose.msra.mxu0 0.0
        %699 = vmatpush.xpose.msra.mxu0 0.0
        %700 = vmatpush.xpose.msra.mxu0 0.0
        %701 = vmatpush.xpose.msra.mxu0 0.0
        %702 = vmatpush.xpose.msra.mxu0 0.0
        %703 = vmatpush.xpose.msra.mxu0 0.0
        %704 = vmatpush.xpose.msra.mxu0 0.0
        %705 = vmatpush.xpose.msra.mxu0 0.0
        %706 = vmatpush.xpose.msra.mxu0 0.0
        %707 = vmatpush.xpose.msra.mxu0 0.0
        %708 = vmatpush.xpose.msra.mxu0 0.0
        %709 = vmatpush.xpose.msra.mxu0 0.0
        %710 = vmatpush.xpose.msra.mxu0 0.0
        %711 = vmatpush.xpose.msra.mxu0 0.0
        %712 = vmatpush.xpose.msra.mxu0 %v695
        %713 = vmatmul.f32.gmra.mxu0 %v692
        %v714 = vpop.f32.mrf.mxu0
        %v715 = vadd.f32 0.0, %v714
        %716 = vdwg.mxu0
        %v717 = vsel %vm635, 1, 0
        %v718 = vsel %vm636, 1, 0
        %v719 = vsel %vm637, 1, 0
        %vm720 = vcmp.eq.s32.totalorder %v717, 1
        %vm721 = vcmp.eq.s32.totalorder %v718, 1
        %vm722 = vcmp.eq.s32.totalorder %v719, 1
        %v723 = vsel %vm720, %v663, -1000000.0
        %v724 = vsel %vm721, %v689, -1000000.0
        %v725 = vsel %vm722, %v715, -1000000.0
        %v726 = vsel %vm638, %v723, -inf
        %727 = vmax.xlane.f32.xlu0 %v726
        %v728 = vpop.xlane.xlu0 %727
        %v729 = vsel %vm638, %v724, -inf
        %730 = vmax.xlane.f32.xlu0 %v729
        %v731 = vpop.xlane.xlu0 %730
        %v732 = vsel %vm638, %v725, -inf
        %733 = vmax.xlane.f32.xlu0 %v732
        %v734 = vpop.xlane.xlu0 %733
        %v735 = vsub.f32 %v723, %v728
        %v736 = vsub.f32 %v724, %v731
        %v737 = vsub.f32 %v725, %v734
        %v738 = vmul.f32 %v735, 1.442695
        %v739 = vpow.pop %v738
        %v740 = vmul.f32 %v736, 1.442695
        %v741 = vpow.pop %v740
        %v742 = vmul.f32 %v737, 1.442695
        %v743 = vpow.pop %v742
        %v744 = vsel %vm638, %v739, 0.0
        %745 = vadd.xlane.f32.xlu0 %v744
        %v746 = vpop.xlane.xlu0 %745
        %v747 = vsel %vm638, %v741, 0.0
        %748 = vadd.xlane.f32.xlu0 %v747
        %v749 = vpop.xlane.xlu0 %748
        %v750 = vsel %vm638, %v743, 0.0
        %751 = vadd.xlane.f32.xlu0 %v750
        %v752 = vpop.xlane.xlu0 %751
        %v753 = vrcp.pop %v746
        %v754 = vrcp.pop %v749
        %v755 = vrcp.pop %v752
        %v756 = vmul.f32 %v739, %v753
        %v757 = vmul.f32 %v741, %v754
        %v758 = vmul.f32 %v743, %v755
        %v760 = vsel %vm638, %v756, 0
        %762 = vmatpush.msra.mxu0 0.0
        %763 = vmatpush.msra.mxu0 0.0
        %764 = vmatpush.msra.mxu0 0.0
        %765 = vmatpush.msra.mxu0 0.0
        %766 = vmatpush.msra.mxu0 0.0
        %767 = vmatpush.msra.mxu0 0.0
        %768 = vmatpush.msra.mxu0 0.0
        %769 = vmatpush.msra.mxu0 0.0
        %770 = vmatpush.msra.mxu0 0.0
        %771 = vmatpush.msra.mxu0 0.0
        %772 = vmatpush.msra.mxu0 0.0
        %773 = vmatpush.msra.mxu0 0.0
        %774 = vmatpush.msra.mxu0 0.0
        %775 = vmatpush.msra.mxu0 0.0
        %776 = vmatpush.msra.mxu0 0.0
        %777 = vmatpush.msra.mxu0 %v608
        %778 = vmatmul.f32.gmra.mxu0 %v760
        %v779 = vpop.f32.mrf.mxu0
        %v780 = vadd.f32 0.0, %v779
        %781 = vdwg.mxu0
        %v783 = vsel %vm638, %v757, 0
        %785 = vmatpush.msra.mxu0 0.0
        %786 = vmatpush.msra.mxu0 0.0
        %787 = vmatpush.msra.mxu0 0.0
        %788 = vmatpush.msra.mxu0 0.0
        %789 = vmatpush.msra.mxu0 0.0
        %790 = vmatpush.msra.mxu0 0.0
        %791 = vmatpush.msra.mxu0 0.0
        %792 = vmatpush.msra.mxu0 0.0
        %793 = vmatpush.msra.mxu0 0.0
        %794 = vmatpush.msra.mxu0 0.0
        %795 = vmatpush.msra.mxu0 0.0
        %796 = vmatpush.msra.mxu0 0.0
        %797 = vmatpush.msra.mxu0 0.0
        %798 = vmatpush.msra.mxu0 0.0
        %799 = vmatpush.msra.mxu0 0.0
        %800 = vmatpush.msra.mxu0 %v611
        %801 = vmatmul.f32.gmra.mxu0 %v783
        %v802 = vpop.f32.mrf.mxu0
        %v803 = vadd.f32 0.0, %v802
        %804 = vdwg.mxu0
        %v806 = vsel %vm638, %v758, 0
        %808 = vmatpush.msra.mxu0 0.0
        %809 = vmatpush.msra.mxu0 0.0
        %810 = vmatpush.msra.mxu0 0.0
        %811 = vmatpush.msra.mxu0 0.0
        %812 = vmatpush.msra.mxu0 0.0
        %813 = vmatpush.msra.mxu0 0.0
        %814 = vmatpush.msra.mxu0 0.0
        %815 = vmatpush.msra.mxu0 0.0
        %816 = vmatpush.msra.mxu0 0.0
        %817 = vmatpush.msra.mxu0 0.0
        %818 = vmatpush.msra.mxu0 0.0
        %819 = vmatpush.msra.mxu0 0.0
        %820 = vmatpush.msra.mxu0 0.0
        %821 = vmatpush.msra.mxu0 0.0
        %822 = vmatpush.msra.mxu0 0.0
        %823 = vmatpush.msra.mxu0 %v614
        %824 = vmatmul.f32.gmra.mxu0 %v806
        %v825 = vpop.f32.mrf.mxu0
        %v826 = vadd.f32 0.0, %v825
        %827 = vdwg.mxu0
        %828 = vst.msk [vmem:[%s479] sm:$0xff] %vm638, %v780
        %829 = vst.msk [vmem:[%s479 + $0x8] sm:$0xff] %vm638, %v803
        %830 = vst.msk [vmem:[%s479 + $0x10] sm:$0xff] %vm638, %v826
        %831 = vst.msk [vmem:[%s486] sm:$0xff] %vm638, %v756
        %832 = vst.msk [vmem:[%s486 + $0x8] sm:$0xff] %vm638, %v757
        %833 = vst.msk [vmem:[%s486 + $0x10] sm:$0xff] %vm638, %v758
        %834 = vrot.lane.b32.xlu0 %v539, 120
        %v835 = vpop.permute.xlu0 %834
        %836 = vrot.lane.b32.xlu0 %v571, 120
        %v837 = vpop.permute.xlu0 %836
        %v838 = vsel %vm638, %v835, 0
        %v840 = vsel %vm638, %v837, 0
        %842 = vmatpush.xpose.msra.mxu0 0.0
        %843 = vmatpush.xpose.msra.mxu0 0.0
        %844 = vmatpush.xpose.msra.mxu0 0.0
        %845 = vmatpush.xpose.msra.mxu0 0.0
        %846 = vmatpush.xpose.msra.mxu0 0.0
        %847 = vmatpush.xpose.msra.mxu0 0.0
        %848 = vmatpush.xpose.msra.mxu0 0.0
        %849 = vmatpush.xpose.msra.mxu0 0.0
        %850 = vmatpush.xpose.msra.mxu0 0.0
        %851 = vmatpush.xpose.msra.mxu0 0.0
        %852 = vmatpush.xpose.msra.mxu0 0.0
        %853 = vmatpush.xpose.msra.mxu0 0.0
        %854 = vmatpush.xpose.msra.mxu0 0.0
        %855 = vmatpush.xpose.msra.mxu0 0.0
        %856 = vmatpush.xpose.msra.mxu0 0.0
        %857 = vmatpush.xpose.msra.mxu0 %v840
        %858 = vmatmul.f32.gmra.mxu0 %v838
        %v859 = vpop.f32.mrf.mxu0
        %v860 = vadd.f32 0.0, %v859
        %861 = vdwg.mxu0
        %862 = vrot.lane.b32.xlu0 %v540, 120
        %v863 = vpop.permute.xlu0 %862
        %864 = vrot.lane.b32.xlu0 %v574, 120
        %v865 = vpop.permute.xlu0 %864
        %v866 = vsel %vm638, %v863, 0
        %v868 = vsel %vm638, %v865, 0
        %870 = vmatpush.xpose.msra.mxu0 0.0
        %871 = vmatpush.xpose.msra.mxu0 0.0
        %872 = vmatpush.xpose.msra.mxu0 0.0
        %873 = vmatpush.xpose.msra.mxu0 0.0
        %874 = vmatpush.xpose.msra.mxu0 0.0
        %875 = vmatpush.xpose.msra.mxu0 0.0
        %876 = vmatpush.xpose.msra.mxu0 0.0
        %877 = vmatpush.xpose.msra.mxu0 0.0
        %878 = vmatpush.xpose.msra.mxu0 0.0
        %879 = vmatpush.xpose.msra.mxu0 0.0
        %880 = vmatpush.xpose.msra.mxu0 0.0
        %881 = vmatpush.xpose.msra.mxu0 0.0
        %882 = vmatpush.xpose.msra.mxu0 0.0
        %883 = vmatpush.xpose.msra.mxu0 0.0
        %884 = vmatpush.xpose.msra.mxu0 0.0
        %885 = vmatpush.xpose.msra.mxu0 %v868
        %886 = vmatmul.f32.gmra.mxu0 %v866
        %v887 = vpop.f32.mrf.mxu0
        %v888 = vadd.f32 0.0, %v887
        %889 = vdwg.mxu0
        %890 = vrot.lane.b32.xlu0 %v541, 120
        %v891 = vpop.permute.xlu0 %890
        %892 = vrot.lane.b32.xlu0 %v577, 120
        %v893 = vpop.permute.xlu0 %892
        %v894 = vsel %vm638, %v891, 0
        %v896 = vsel %vm638, %v893, 0
        %898 = vmatpush.xpose.msra.mxu0 0.0
        %899 = vmatpush.xpose.msra.mxu0 0.0
        %900 = vmatpush.xpose.msra.mxu0 0.0
        %901 = vmatpush.xpose.msra.mxu0 0.0
        %902 = vmatpush.xpose.msra.mxu0 0.0
        %903 = vmatpush.xpose.msra.mxu0 0.0
        %904 = vmatpush.xpose.msra.mxu0 0.0
        %905 = vmatpush.xpose.msra.mxu0 0.0
        %906 = vmatpush.xpose.msra.mxu0 0.0
        %907 = vmatpush.xpose.msra.mxu0 0.0
        %908 = vmatpush.xpose.msra.mxu0 0.0
        %909 = vmatpush.xpose.msra.mxu0 0.0
        %910 = vmatpush.xpose.msra.mxu0 0.0
        %911 = vmatpush.xpose.msra.mxu0 0.0
        %912 = vmatpush.xpose.msra.mxu0 0.0
        %913 = vmatpush.xpose.msra.mxu0 %v896
        %914 = vmatmul.f32.gmra.mxu0 %v894
        %v915 = vpop.f32.mrf.mxu0
        %v916 = vadd.f32 0.0, %v915
        %917 = vdwg.mxu0
        %v918 = vsel %vm720, %v860, -1000000.0
        %v919 = vsel %vm721, %v888, -1000000.0
        %v920 = vsel %vm722, %v916, -1000000.0
        %v921 = vsel %vm638, %v918, -inf
        %922 = vmax.xlane.f32.xlu0 %v921
        %v923 = vpop.xlane.xlu0 %922
        %v924 = vsel %vm638, %v919, -inf
        %925 = vmax.xlane.f32.xlu0 %v924
        %v926 = vpop.xlane.xlu0 %925
        %v927 = vsel %vm638, %v920, -inf
        %928 = vmax.xlane.f32.xlu0 %v927
        %v929 = vpop.xlane.xlu0 %928
        %v930 = vsub.f32 %v918, %v923
        %v931 = vsub.f32 %v919, %v926
        %v932 = vsub.f32 %v920, %v929
        %v933 = vmul.f32 %v930, 1.442695
        %v934 = vpow.pop %v933
        %v935 = vmul.f32 %v931, 1.442695
        %v936 = vpow.pop %v935
        %v937 = vmul.f32 %v932, 1.442695
        %v938 = vpow.pop %v937
        %v939 = vsel %vm638, %v934, 0.0
        %940 = vadd.xlane.f32.xlu0 %v939
        %v941 = vpop.xlane.xlu0 %940
        %v942 = vsel %vm638, %v936, 0.0
        %943 = vadd.xlane.f32.xlu0 %v942
        %v944 = vpop.xlane.xlu0 %943
        %v945 = vsel %vm638, %v938, 0.0
        %946 = vadd.xlane.f32.xlu0 %v945
        %v947 = vpop.xlane.xlu0 %946
        %v948 = vrcp.pop %v941
        %v949 = vrcp.pop %v944
        %v950 = vrcp.pop %v947
        %v951 = vmul.f32 %v934, %v948
        %v952 = vmul.f32 %v936, %v949
        %v953 = vmul.f32 %v938, %v950
        %955 = vrot.lane.b32.xlu0 %v608, 120
        %v956 = vpop.permute.xlu0 %955
        %v959 = vsel %vm638, %v951, 0
        %961 = vmatpush.msra.mxu0 0.0
        %962 = vmatpush.msra.mxu0 0.0
        %963 = vmatpush.msra.mxu0 0.0
        %964 = vmatpush.msra.mxu0 0.0
        %965 = vmatpush.msra.mxu0 0.0
        %966 = vmatpush.msra.mxu0 0.0
        %967 = vmatpush.msra.mxu0 0.0
        %968 = vmatpush.msra.mxu0 0.0
        %969 = vmatpush.msra.mxu0 0.0
        %970 = vmatpush.msra.mxu0 0.0
        %971 = vmatpush.msra.mxu0 0.0
        %972 = vmatpush.msra.mxu0 0.0
        %973 = vmatpush.msra.mxu0 0.0
        %974 = vmatpush.msra.mxu0 0.0
        %975 = vmatpush.msra.mxu0 0.0
        %976 = vmatpush.msra.mxu0 %v956
        %977 = vmatmul.f32.gmra.mxu0 %v959
        %v978 = vpop.f32.mrf.mxu0
        %v979 = vadd.f32 0.0, %v978
        %980 = vdwg.mxu0
        %982 = vrot.lane.b32.xlu0 %v611, 120
        %v983 = vpop.permute.xlu0 %982
        %v986 = vsel %vm638, %v952, 0
        %988 = vmatpush.msra.mxu0 0.0
        %989 = vmatpush.msra.mxu0 0.0
        %990 = vmatpush.msra.mxu0 0.0
        %991 = vmatpush.msra.mxu0 0.0
        %992 = vmatpush.msra.mxu0 0.0
        %993 = vmatpush.msra.mxu0 0.0
        %994 = vmatpush.msra.mxu0 0.0
        %995 = vmatpush.msra.mxu0 0.0
        %996 = vmatpush.msra.mxu0 0.0
        %997 = vmatpush.msra.mxu0 0.0
        %998 = vmatpush.msra.mxu0 0.0
        %999 = vmatpush.msra.mxu0 0.0
        %1000 = vmatpush.msra.mxu0 0.0
        %1001 = vmatpush.msra.mxu0 0.0
        %1002 = vmatpush.msra.mxu0 0.0
        %1003 = vmatpush.msra.mxu0 %v983
        %1004 = vmatmul.f32.gmra.mxu0 %v986
        %v1005 = vpop.f32.mrf.mxu0
        %v1006 = vadd.f32 0.0, %v1005
        %1007 = vdwg.mxu0
        %1009 = vrot.lane.b32.xlu0 %v614, 120
        %v1010 = vpop.permute.xlu0 %1009
        %v1013 = vsel %vm638, %v953, 0
        %1015 = vmatpush.msra.mxu0 0.0
        %1016 = vmatpush.msra.mxu0 0.0
        %1017 = vmatpush.msra.mxu0 0.0
        %1018 = vmatpush.msra.mxu0 0.0
        %1019 = vmatpush.msra.mxu0 0.0
        %1020 = vmatpush.msra.mxu0 0.0
        %1021 = vmatpush.msra.mxu0 0.0
        %1022 = vmatpush.msra.mxu0 0.0
        %1023 = vmatpush.msra.mxu0 0.0
        %1024 = vmatpush.msra.mxu0 0.0
        %1025 = vmatpush.msra.mxu0 0.0
        %1026 = vmatpush.msra.mxu0 0.0
        %1027 = vmatpush.msra.mxu0 0.0
        %1028 = vmatpush.msra.mxu0 0.0
        %1029 = vmatpush.msra.mxu0 0.0
        %1030 = vmatpush.msra.mxu0 %v1010
        %1031 = vmatmul.f32.gmra.mxu0 %v1013
        %v1032 = vpop.f32.mrf.mxu0
        %v1033 = vadd.f32 0.0, %v1032
        %1034 = vdwg.mxu0
        %1038 = vrot.lane.b32.xlu0 %v979, 8
        %v1039 = vpop.permute.xlu0 %1038
        %1040 = vrot.lane.b32.xlu0 %v1006, 8
        %v1041 = vpop.permute.xlu0 %1040
        %1042 = vrot.lane.b32.xlu0 %v1033, 8
        %v1043 = vpop.permute.xlu0 %1042
        %vm1047 = vcmask 130112
        %1048 = vst.msk [vmem:[%s479] sm:$0xff] %vm1047, %v1039
        %1049 = vst.msk [vmem:[%s479 + $0x8] sm:$0xff] %vm1047, %v1041
        %1050 = vst.msk [vmem:[%s479 + $0x10] sm:$0xff] %vm1047, %v1043
        %1051 = vrot.lane.b32.xlu0 %v951, 8
        %v1052 = vpop.permute.xlu0 %1051
        %1053 = vrot.lane.b32.xlu0 %v952, 8
        %v1054 = vpop.permute.xlu0 %1053
        %1055 = vrot.lane.b32.xlu0 %v953, 8
        %v1056 = vpop.permute.xlu0 %1055
        %1060 = vst.msk [vmem:[%s486] sm:$0xff] %vm1047, %v1052
        %1061 = vst.msk [vmem:[%s486 + $0x8] sm:$0xff] %vm1047, %v1054
        %1062 = vst.msk [vmem:[%s486 + $0x10] sm:$0xff] %vm1047, %v1056
        %1063 = vrot.lane.b32.xlu0 %v539, 112
        %v1064 = vpop.permute.xlu0 %1063
        %1065 = vrot.lane.b32.xlu0 %v571, 112
        %v1066 = vpop.permute.xlu0 %1065
        %v1067 = vsel %vm638, %v1064, 0
        %v1069 = vsel %vm638, %v1066, 0
        %1071 = vmatpush.xpose.msra.mxu0 0.0
        %1072 = vmatpush.xpose.msra.mxu0 0.0
        %1073 = vmatpush.xpose.msra.mxu0 0.0
        %1074 = vmatpush.xpose.msra.mxu0 0.0
        %1075 = vmatpush.xpose.msra.mxu0 0.0
        %1076 = vmatpush.xpose.msra.mxu0 0.0
        %1077 = vmatpush.xpose.msra.mxu0 0.0
        %1078 = vmatpush.xpose.msra.mxu0 0.0
        %1079 = vmatpush.xpose.msra.mxu0 0.0
        %1080 = vmatpush.xpose.msra.mxu0 0.0
        %1081 = vmatpush.xpose.msra.mxu0 0.0
        %1082 = vmatpush.xpose.msra.mxu0 0.0
        %1083 = vmatpush.xpose.msra.mxu0 0.0
        %1084 = vmatpush.xpose.msra.mxu0 0.0
        %1085 = vmatpush.xpose.msra.mxu0 0.0
        %1086 = vmatpush.xpose.msra.mxu0 %v1069
        %1087 = vmatmul.f32.gmra.mxu0 %v1067
        %v1088 = vpop.f32.mrf.mxu0
        %v1089 = vadd.f32 0.0, %v1088
        %1090 = vdwg.mxu0
        %1091 = vrot.lane.b32.xlu0 %v540, 112
        %v1092 = vpop.permute.xlu0 %1091
        %1093 = vrot.lane.b32.xlu0 %v574, 112
        %v1094 = vpop.permute.xlu0 %1093
        %v1095 = vsel %vm638, %v1092, 0
        %v1097 = vsel %vm638, %v1094, 0
        %1099 = vmatpush.xpose.msra.mxu0 0.0
        %1100 = vmatpush.xpose.msra.mxu0 0.0
        %1101 = vmatpush.xpose.msra.mxu0 0.0
        %1102 = vmatpush.xpose.msra.mxu0 0.0
        %1103 = vmatpush.xpose.msra.mxu0 0.0
        %1104 = vmatpush.xpose.msra.mxu0 0.0
        %1105 = vmatpush.xpose.msra.mxu0 0.0
        %1106 = vmatpush.xpose.msra.mxu0 0.0
        %1107 = vmatpush.xpose.msra.mxu0 0.0
        %1108 = vmatpush.xpose.msra.mxu0 0.0
        %1109 = vmatpush.xpose.msra.mxu0 0.0
        %1110 = vmatpush.xpose.msra.mxu0 0.0
        %1111 = vmatpush.xpose.msra.mxu0 0.0
        %1112 = vmatpush.xpose.msra.mxu0 0.0
        %1113 = vmatpush.xpose.msra.mxu0 0.0
        %1114 = vmatpush.xpose.msra.mxu0 %v1097
        %1115 = vmatmul.f32.gmra.mxu0 %v1095
        %v1116 = vpop.f32.mrf.mxu0
        %v1117 = vadd.f32 0.0, %v1116
        %1118 = vdwg.mxu0
        %1119 = vrot.lane.b32.xlu0 %v541, 112
        %v1120 = vpop.permute.xlu0 %1119
        %1121 = vrot.lane.b32.xlu0 %v577, 112
        %v1122 = vpop.permute.xlu0 %1121
        %v1123 = vsel %vm638, %v1120, 0
        %v1125 = vsel %vm638, %v1122, 0
        %1127 = vmatpush.xpose.msra.mxu0 0.0
        %1128 = vmatpush.xpose.msra.mxu0 0.0
        %1129 = vmatpush.xpose.msra.mxu0 0.0
        %1130 = vmatpush.xpose.msra.mxu0 0.0
        %1131 = vmatpush.xpose.msra.mxu0 0.0
        %1132 = vmatpush.xpose.msra.mxu0 0.0
        %1133 = vmatpush.xpose.msra.mxu0 0.0
        %1134 = vmatpush.xpose.msra.mxu0 0.0
        %1135 = vmatpush.xpose.msra.mxu0 0.0
        %1136 = vmatpush.xpose.msra.mxu0 0.0
        %1137 = vmatpush.xpose.msra.mxu0 0.0
        %1138 = vmatpush.xpose.msra.mxu0 0.0
        %1139 = vmatpush.xpose.msra.mxu0 0.0
        %1140 = vmatpush.xpose.msra.mxu0 0.0
        %1141 = vmatpush.xpose.msra.mxu0 0.0
        %1142 = vmatpush.xpose.msra.mxu0 %v1125
        %1143 = vmatmul.f32.gmra.mxu0 %v1123
        %v1144 = vpop.f32.mrf.mxu0
        %v1145 = vadd.f32 0.0, %v1144
        %1146 = vdwg.mxu0
        %v1147 = vsel %vm720, %v1089, -1000000.0
        %v1148 = vsel %vm721, %v1117, -1000000.0
        %v1149 = vsel %vm722, %v1145, -1000000.0
        %v1150 = vsel %vm638, %v1147, -inf
        %1151 = vmax.xlane.f32.xlu0 %v1150
        %v1152 = vpop.xlane.xlu0 %1151
        %v1153 = vsel %vm638, %v1148, -inf
        %1154 = vmax.xlane.f32.xlu0 %v1153
        %v1155 = vpop.xlane.xlu0 %1154
        %v1156 = vsel %vm638, %v1149, -inf
        %1157 = vmax.xlane.f32.xlu0 %v1156
        %v1158 = vpop.xlane.xlu0 %1157
        %v1159 = vsub.f32 %v1147, %v1152
        %v1160 = vsub.f32 %v1148, %v1155
        %v1161 = vsub.f32 %v1149, %v1158
        %v1162 = vmul.f32 %v1159, 1.442695
        %v1163 = vpow.pop %v1162
        %v1164 = vmul.f32 %v1160, 1.442695
        %v1165 = vpow.pop %v1164
        %v1166 = vmul.f32 %v1161, 1.442695
        %v1167 = vpow.pop %v1166
        %v1168 = vsel %vm638, %v1163, 0.0
        %1169 = vadd.xlane.f32.xlu0 %v1168
        %v1170 = vpop.xlane.xlu0 %1169
        %v1171 = vsel %vm638, %v1165, 0.0
        %1172 = vadd.xlane.f32.xlu0 %v1171
        %v1173 = vpop.xlane.xlu0 %1172
        %v1174 = vsel %vm638, %v1167, 0.0
        %1175 = vadd.xlane.f32.xlu0 %v1174
        %v1176 = vpop.xlane.xlu0 %1175
        %v1177 = vrcp.pop %v1170
        %v1178 = vrcp.pop %v1173
        %v1179 = vrcp.pop %v1176
        %v1180 = vmul.f32 %v1163, %v1177
        %v1181 = vmul.f32 %v1165, %v1178
        %v1182 = vmul.f32 %v1167, %v1179
        %1183 = vrot.lane.b32.xlu0 %v608, 112
        %v1184 = vpop.permute.xlu0 %1183
        %v1187 = vsel %vm638, %v1180, 0
        %1189 = vmatpush.msra.mxu0 0.0
        %1190 = vmatpush.msra.mxu0 0.0
        %1191 = vmatpush.msra.mxu0 0.0
        %1192 = vmatpush.msra.mxu0 0.0
        %1193 = vmatpush.msra.mxu0 0.0
        %1194 = vmatpush.msra.mxu0 0.0
        %1195 = vmatpush.msra.mxu0 0.0
        %1196 = vmatpush.msra.mxu0 0.0
        %1197 = vmatpush.msra.mxu0 0.0
        %1198 = vmatpush.msra.mxu0 0.0
        %1199 = vmatpush.msra.mxu0 0.0
        %1200 = vmatpush.msra.mxu0 0.0
        %1201 = vmatpush.msra.mxu0 0.0
        %1202 = vmatpush.msra.mxu0 0.0
        %1203 = vmatpush.msra.mxu0 0.0
        %1204 = vmatpush.msra.mxu0 %v1184
        %1205 = vmatmul.f32.gmra.mxu0 %v1187
        %v1206 = vpop.f32.mrf.mxu0
        %v1207 = vadd.f32 0.0, %v1206
        %1208 = vdwg.mxu0
        %1209 = vrot.lane.b32.xlu0 %v611, 112
        %v1210 = vpop.permute.xlu0 %1209
        %v1213 = vsel %vm638, %v1181, 0
        %1215 = vmatpush.msra.mxu0 0.0
        %1216 = vmatpush.msra.mxu0 0.0
        %1217 = vmatpush.msra.mxu0 0.0
        %1218 = vmatpush.msra.mxu0 0.0
        %1219 = vmatpush.msra.mxu0 0.0
        %1220 = vmatpush.msra.mxu0 0.0
        %1221 = vmatpush.msra.mxu0 0.0
        %1222 = vmatpush.msra.mxu0 0.0
        %1223 = vmatpush.msra.mxu0 0.0
        %1224 = vmatpush.msra.mxu0 0.0
        %1225 = vmatpush.msra.mxu0 0.0
        %1226 = vmatpush.msra.mxu0 0.0
        %1227 = vmatpush.msra.mxu0 0.0
        %1228 = vmatpush.msra.mxu0 0.0
        %1229 = vmatpush.msra.mxu0 0.0
        %1230 = vmatpush.msra.mxu0 %v1210
        %1231 = vmatmul.f32.gmra.mxu0 %v1213
        %v1232 = vpop.f32.mrf.mxu0
        %v1233 = vadd.f32 0.0, %v1232
        %1234 = vdwg.mxu0
        %1235 = vrot.lane.b32.xlu0 %v614, 112
        %v1236 = vpop.permute.xlu0 %1235
        %v1239 = vsel %vm638, %v1182, 0
        %1241 = vmatpush.msra.mxu0 0.0
        %1242 = vmatpush.msra.mxu0 0.0
        %1243 = vmatpush.msra.mxu0 0.0
        %1244 = vmatpush.msra.mxu0 0.0
        %1245 = vmatpush.msra.mxu0 0.0
        %1246 = vmatpush.msra.mxu0 0.0
        %1247 = vmatpush.msra.mxu0 0.0
        %1248 = vmatpush.msra.mxu0 0.0
        %1249 = vmatpush.msra.mxu0 0.0
        %1250 = vmatpush.msra.mxu0 0.0
        %1251 = vmatpush.msra.mxu0 0.0
        %1252 = vmatpush.msra.mxu0 0.0
        %1253 = vmatpush.msra.mxu0 0.0
        %1254 = vmatpush.msra.mxu0 0.0
        %1255 = vmatpush.msra.mxu0 0.0
        %1256 = vmatpush.msra.mxu0 %v1236
        %1257 = vmatmul.f32.gmra.mxu0 %v1239
        %v1258 = vpop.f32.mrf.mxu0
        %v1259 = vadd.f32 0.0, %v1258
        %1260 = vdwg.mxu0
        %1264 = vrot.lane.b32.xlu0 %v1207, 16
        %v1265 = vpop.permute.xlu0 %1264
        %1266 = vrot.lane.b32.xlu0 %v1233, 16
        %v1267 = vpop.permute.xlu0 %1266
        %1268 = vrot.lane.b32.xlu0 %v1259, 16
        %v1269 = vpop.permute.xlu0 %1268
        %vm1273 = vcmask 195712
        %1274 = vst.msk [vmem:[%s479] sm:$0xff] %vm1273, %v1265
        %1275 = vst.msk [vmem:[%s479 + $0x8] sm:$0xff] %vm1273, %v1267
        %1276 = vst.msk [vmem:[%s479 + $0x10] sm:$0xff] %vm1273, %v1269
        %1277 = vrot.lane.b32.xlu0 %v1180, 16
        %v1278 = vpop.permute.xlu0 %1277
        %1279 = vrot.lane.b32.xlu0 %v1181, 16
        %v1280 = vpop.permute.xlu0 %1279
        %1281 = vrot.lane.b32.xlu0 %v1182, 16
        %v1282 = vpop.permute.xlu0 %1281
        %1286 = vst.msk [vmem:[%s486] sm:$0xff] %vm1273, %v1278
        %1287 = vst.msk [vmem:[%s486 + $0x8] sm:$0xff] %vm1273, %v1280
        %1288 = vst.msk [vmem:[%s486 + $0x10] sm:$0xff] %vm1273, %v1282
        %1289 = vrot.lane.b32.xlu0 %v539, 104
        %v1290 = vpop.permute.xlu0 %1289
        %1291 = vrot.lane.b32.xlu0 %v571, 104
        %v1292 = vpop.permute.xlu0 %1291
        %v1293 = vsel %vm638, %v1290, 0
        %v1295 = vsel %vm638, %v1292, 0
        %1297 = vmatpush.xpose.msra.mxu0 0.0
        %1298 = vmatpush.xpose.msra.mxu0 0.0
        %1299 = vmatpush.xpose.msra.mxu0 0.0
        %1300 = vmatpush.xpose.msra.mxu0 0.0
        %1301 = vmatpush.xpose.msra.mxu0 0.0
        %1302 = vmatpush.xpose.msra.mxu0 0.0
        %1303 = vmatpush.xpose.msra.mxu0 0.0
        %1304 = vmatpush.xpose.msra.mxu0 0.0
        %1305 = vmatpush.xpose.msra.mxu0 0.0
        %1306 = vmatpush.xpose.msra.mxu0 0.0
        %1307 = vmatpush.xpose.msra.mxu0 0.0
        %1308 = vmatpush.xpose.msra.mxu0 0.0
        %1309 = vmatpush.xpose.msra.mxu0 0.0
        %1310 = vmatpush.xpose.msra.mxu0 0.0
        %1311 = vmatpush.xpose.msra.mxu0 0.0
        %1312 = vmatpush.xpose.msra.mxu0 %v1295
        %1313 = vmatmul.f32.gmra.mxu0 %v1293
        %v1314 = vpop.f32.mrf.mxu0
        %v1315 = vadd.f32 0.0, %v1314
        %1316 = vdwg.mxu0
        %1317 = vrot.lane.b32.xlu0 %v540, 104
        %v1318 = vpop.permute.xlu0 %1317
        %1319 = vrot.lane.b32.xlu0 %v574, 104
        %v1320 = vpop.permute.xlu0 %1319
        %v1321 = vsel %vm638, %v1318, 0
        %v1323 = vsel %vm638, %v1320, 0
        %1325 = vmatpush.xpose.msra.mxu0 0.0
        %1326 = vmatpush.xpose.msra.mxu0 0.0
        %1327 = vmatpush.xpose.msra.mxu0 0.0
        %1328 = vmatpush.xpose.msra.mxu0 0.0
        %1329 = vmatpush.xpose.msra.mxu0 0.0
        %1330 = vmatpush.xpose.msra.mxu0 0.0
        %1331 = vmatpush.xpose.msra.mxu0 0.0
        %1332 = vmatpush.xpose.msra.mxu0 0.0
        %1333 = vmatpush.xpose.msra.mxu0 0.0
        %1334 = vmatpush.xpose.msra.mxu0 0.0
        %1335 = vmatpush.xpose.msra.mxu0 0.0
        %1336 = vmatpush.xpose.msra.mxu0 0.0
        %1337 = vmatpush.xpose.msra.mxu0 0.0
        %1338 = vmatpush.xpose.msra.mxu0 0.0
        %1339 = vmatpush.xpose.msra.mxu0 0.0
        %1340 = vmatpush.xpose.msra.mxu0 %v1323
        %1341 = vmatmul.f32.gmra.mxu0 %v1321
        %v1342 = vpop.f32.mrf.mxu0
        %v1343 = vadd.f32 0.0, %v1342
        %1344 = vdwg.mxu0
        %1345 = vrot.lane.b32.xlu0 %v541, 104
        %v1346 = vpop.permute.xlu0 %1345
        %1347 = vrot.lane.b32.xlu0 %v577, 104
        %v1348 = vpop.permute.xlu0 %1347
        %v1349 = vsel %vm638, %v1346, 0
        %v1351 = vsel %vm638, %v1348, 0
        %1353 = vmatpush.xpose.msra.mxu0 0.0
        %1354 = vmatpush.xpose.msra.mxu0 0.0
        %1355 = vmatpush.xpose.msra.mxu0 0.0
        %1356 = vmatpush.xpose.msra.mxu0 0.0
        %1357 = vmatpush.xpose.msra.mxu0 0.0
        %1358 = vmatpush.xpose.msra.mxu0 0.0
        %1359 = vmatpush.xpose.msra.mxu0 0.0
        %1360 = vmatpush.xpose.msra.mxu0 0.0
        %1361 = vmatpush.xpose.msra.mxu0 0.0
        %1362 = vmatpush.xpose.msra.mxu0 0.0
        %1363 = vmatpush.xpose.msra.mxu0 0.0
        %1364 = vmatpush.xpose.msra.mxu0 0.0
        %1365 = vmatpush.xpose.msra.mxu0 0.0
        %1366 = vmatpush.xpose.msra.mxu0 0.0
        %1367 = vmatpush.xpose.msra.mxu0 0.0
        %1368 = vmatpush.xpose.msra.mxu0 %v1351
        %1369 = vmatmul.f32.gmra.mxu0 %v1349
        %v1370 = vpop.f32.mrf.mxu0
        %v1371 = vadd.f32 0.0, %v1370
        %1372 = vdwg.mxu0
        %v1373 = vsel %vm720, %v1315, -1000000.0
        %v1374 = vsel %vm721, %v1343, -1000000.0
        %v1375 = vsel %vm722, %v1371, -1000000.0
        %v1376 = vsel %vm638, %v1373, -inf
        %1377 = vmax.xlane.f32.xlu0 %v1376
        %v1378 = vpop.xlane.xlu0 %1377
        %v1379 = vsel %vm638, %v1374, -inf
        %1380 = vmax.xlane.f32.xlu0 %v1379
        %v1381 = vpop.xlane.xlu0 %1380
        %v1382 = vsel %vm638, %v1375, -inf
        %1383 = vmax.xlane.f32.xlu0 %v1382
        %v1384 = vpop.xlane.xlu0 %1383
        %v1385 = vsub.f32 %v1373, %v1378
        %v1386 = vsub.f32 %v1374, %v1381
        %v1387 = vsub.f32 %v1375, %v1384
        %v1388 = vmul.f32 %v1385, 1.442695
        %v1389 = vpow.pop %v1388
        %v1390 = vmul.f32 %v1386, 1.442695
        %v1391 = vpow.pop %v1390
        %v1392 = vmul.f32 %v1387, 1.442695
        %v1393 = vpow.pop %v1392
        %v1394 = vsel %vm638, %v1389, 0.0
        %1395 = vadd.xlane.f32.xlu0 %v1394
        %v1396 = vpop.xlane.xlu0 %1395
        %v1397 = vsel %vm638, %v1391, 0.0
        %1398 = vadd.xlane.f32.xlu0 %v1397
        %v1399 = vpop.xlane.xlu0 %1398
        %v1400 = vsel %vm638, %v1393, 0.0
        %1401 = vadd.xlane.f32.xlu0 %v1400
        %v1402 = vpop.xlane.xlu0 %1401
        %v1403 = vrcp.pop %v1396
        %v1404 = vrcp.pop %v1399
        %v1405 = vrcp.pop %v1402
        %v1406 = vmul.f32 %v1389, %v1403
        %v1407 = vmul.f32 %v1391, %v1404
        %v1408 = vmul.f32 %v1393, %v1405
        %1409 = vrot.lane.b32.xlu0 %v608, 104
        %v1410 = vpop.permute.xlu0 %1409
        %v1413 = vsel %vm638, %v1406, 0
        %1415 = vmatpush.msra.mxu0 0.0
        %1416 = vmatpush.msra.mxu0 0.0
        %1417 = vmatpush.msra.mxu0 0.0
        %1418 = vmatpush.msra.mxu0 0.0
        %1419 = vmatpush.msra.mxu0 0.0
        %1420 = vmatpush.msra.mxu0 0.0
        %1421 = vmatpush.msra.mxu0 0.0
        %1422 = vmatpush.msra.mxu0 0.0
        %1423 = vmatpush.msra.mxu0 0.0
        %1424 = vmatpush.msra.mxu0 0.0
        %1425 = vmatpush.msra.mxu0 0.0
        %1426 = vmatpush.msra.mxu0 0.0
        %1427 = vmatpush.msra.mxu0 0.0
        %1428 = vmatpush.msra.mxu0 0.0
        %1429 = vmatpush.msra.mxu0 0.0
        %1430 = vmatpush.msra.mxu0 %v1410
        %1431 = vmatmul.f32.gmra.mxu0 %v1413
        %v1432 = vpop.f32.mrf.mxu0
        %v1433 = vadd.f32 0.0, %v1432
        %1434 = vdwg.mxu0
        %1435 = vrot.lane.b32.xlu0 %v611, 104
        %v1436 = vpop.permute.xlu0 %1435
        %v1439 = vsel %vm638, %v1407, 0
        %1441 = vmatpush.msra.mxu0 0.0
        %1442 = vmatpush.msra.mxu0 0.0
        %1443 = vmatpush.msra.mxu0 0.0
        %1444 = vmatpush.msra.mxu0 0.0
        %1445 = vmatpush.msra.mxu0 0.0
        %1446 = vmatpush.msra.mxu0 0.0
        %1447 = vmatpush.msra.mxu0 0.0
        %1448 = vmatpush.msra.mxu0 0.0
        %1449 = vmatpush.msra.mxu0 0.0
        %1450 = vmatpush.msra.mxu0 0.0
        %1451 = vmatpush.msra.mxu0 0.0
        %1452 = vmatpush.msra.mxu0 0.0
        %1453 = vmatpush.msra.mxu0 0.0
        %1454 = vmatpush.msra.mxu0 0.0
        %1455 = vmatpush.msra.mxu0 0.0
        %1456 = vmatpush.msra.mxu0 %v1436
        %1457 = vmatmul.f32.gmra.mxu0 %v1439
        %v1458 = vpop.f32.mrf.mxu0
        %v1459 = vadd.f32 0.0, %v1458
        %1460 = vdwg.mxu0
        %1461 = vrot.lane.b32.xlu0 %v614, 104
        %v1462 = vpop.permute.xlu0 %1461
        %v1465 = vsel %vm638, %v1408, 0
        %1467 = vmatpush.msra.mxu0 0.0
        %1468 = vmatpush.msra.mxu0 0.0
        %1469 = vmatpush.msra.mxu0 0.0
        %1470 = vmatpush.msra.mxu0 0.0
        %1471 = vmatpush.msra.mxu0 0.0
        %1472 = vmatpush.msra.mxu0 0.0
        %1473 = vmatpush.msra.mxu0 0.0
        %1474 = vmatpush.msra.mxu0 0.0
        %1475 = vmatpush.msra.mxu0 0.0
        %1476 = vmatpush.msra.mxu0 0.0
        %1477 = vmatpush.msra.mxu0 0.0
        %1478 = vmatpush.msra.mxu0 0.0
        %1479 = vmatpush.msra.mxu0 0.0
        %1480 = vmatpush.msra.mxu0 0.0
        %1481 = vmatpush.msra.mxu0 0.0
        %1482 = vmatpush.msra.mxu0 %v1462
        %1483 = vmatmul.f32.gmra.mxu0 %v1465
        %v1484 = vpop.f32.mrf.mxu0
        %v1485 = vadd.f32 0.0, %v1484
        %1486 = vdwg.mxu0
        %1490 = vrot.lane.b32.xlu0 %v1433, 24
        %v1491 = vpop.permute.xlu0 %1490
        %1492 = vrot.lane.b32.xlu0 %v1459, 24
        %v1493 = vpop.permute.xlu0 %1492
        %1494 = vrot.lane.b32.xlu0 %v1485, 24
        %v1495 = vpop.permute.xlu0 %1494
        %vm1499 = vcmask 261312
        %1500 = vst.msk [vmem:[%s479] sm:$0xff] %vm1499, %v1491
        %1501 = vst.msk [vmem:[%s479 + $0x8] sm:$0xff] %vm1499, %v1493
        %1502 = vst.msk [vmem:[%s479 + $0x10] sm:$0xff] %vm1499, %v1495
        %1503 = vrot.lane.b32.xlu0 %v1406, 24
        %v1504 = vpop.permute.xlu0 %1503
        %1505 = vrot.lane.b32.xlu0 %v1407, 24
        %v1506 = vpop.permute.xlu0 %1505
        %1507 = vrot.lane.b32.xlu0 %v1408, 24
        %v1508 = vpop.permute.xlu0 %1507
        %1512 = vst.msk [vmem:[%s486] sm:$0xff] %vm1499, %v1504
        %1513 = vst.msk [vmem:[%s486 + $0x8] sm:$0xff] %vm1499, %v1506
        %1514 = vst.msk [vmem:[%s486 + $0x10] sm:$0xff] %vm1499, %v1508
        %s1515 = sand.u32 %s220, 1
        %s1516 = scalar_lea.sflag [#allocation4], %s1515
        %s1517 = sand.u32 %s220, 1
        %s1518 = smul.addr %s1517, 24
        %s1519 = scalar_lea.vmem [#allocation13], %s1518
        %s1520 = sand.u32 %s248, 1
        %s1521 = scalar_lea.sflag [#allocation15], %s1520
        %s1522 = sand.u32 %s248, 1
        %s1523 = smul.addr %s1522, 24
        %s1524 = scalar_lea.vmem [#allocation14], %s1523
        // Predicated region
        $region73: #{tpu_custom_call.1} parent=47 // pred_check
          %p1525 = pneg %p230
        $region74: #{tpu_custom_call.1} parent=47 // pred_check_branch
          %1527 = sbr.rel (%p1525) target = $region76
        $region75: #{tpu_custom_call.1} parent=47 // pred_region
          %s1528 = smul.u32 3, %s38
          %1530 = vsyncadd %s1516, 0
          %s1531 = sadd.s32 %s39, %s1528
          %s1532 = smul.addr %s1531, 8
          %s1533 = scalar_lea.hbm %s7, %s1532
          %s1534 = sshll.u32 %s1519, 4
          %s1535 = int_to_ptr.vmem [resolvable:$true] %s1534
          %s1536 = sshll.u32 %s1533, 4
          %s1537 = int_to_ptr.hbm [resolvable:$true] %s1536
          %1542 = dma.vmem_to_hbm [thread:$0]  %s1535, 384, %s1537, %s1516, 128, 128, 8
        $region76: #{tpu_custom_call.1} parent=47 // pred_fallthru
          _
        // Predicated region
        $region77: #{tpu_custom_call.1} parent=47 // pred_check
          %p1543 = pneg %p258
        $region78: #{tpu_custom_call.1} parent=47 // pred_check_branch
          %1545 = sbr.rel (%p1543) target = $region80
        $region79: #{tpu_custom_call.1} parent=47 // pred_region
          %s1546 = smul.u32 3, %s38
          %1548 = vsyncadd %s1521, 0
          %s1549 = sadd.s32 %s39, %s1546
          %s1550 = smul.addr %s1549, 8
          %s1551 = scalar_lea.hbm %s8, %s1550
          %s1552 = sshll.u32 %s1524, 4
          %s1553 = int_to_ptr.vmem [resolvable:$true] %s1552
          %s1554 = sshll.u32 %s1551, 4
          %s1555 = int_to_ptr.hbm [resolvable:$true] %s1554
          %1560 = dma.vmem_to_hbm [thread:$0]  %s1553, 384, %s1555, %s1521, 128, 128, 8
        $region80: #{tpu_custom_call.1} parent=47 // pred_fallthru
          _
      $region48: #{tpu_custom_call.1} parent=5 // pred_fallthru
        _
      %p1561 = scmp.le.s32.totalorder 2, %s29
      // Predicated region
      $region81: #{tpu_custom_call.1} parent=5 // pred_check
        %p1562 = pneg %p1561
      $region82: #{tpu_custom_call.1} parent=5 // pred_check_branch
        %1564 = sbr.rel (%p1562) target = $region84
      $region83: #{tpu_custom_call.1} parent=5 // pred_region
        %s1565 = ssub.s32 %s29, 2
        // Predicated region
        $region85: #{tpu_custom_call.1} parent=83 // pred_check
          %p1566 = pneg %p236
        $region86: #{tpu_custom_call.1} parent=83 // pred_check_branch
          %1568 = sbr.rel (%p1566) target = $region88
        $region87: #{tpu_custom_call.1} parent=83 // pred_region
          %s1569 = sand.u32 %s221, 1
          %s1570 = scalar_lea.sflag [#allocation4], %s1569
          %s1571 = sand.u32 %s221, 1
          %s1572 = smul.addr %s1571, 24
          %s1573 = scalar_lea.vmem [#allocation13], %s1572
          %1575 = dma.done %s1570, 384
        $region88: #{tpu_custom_call.1} parent=83 // pred_fallthru
          _
        // Predicated region
        $region89: #{tpu_custom_call.1} parent=83 // pred_check
          %p1576 = pneg %p264
        $region90: #{tpu_custom_call.1} parent=83 // pred_check_branch
          %1578 = sbr.rel (%p1576) target = $region92
        $region91: #{tpu_custom_call.1} parent=83 // pred_region
          %s1579 = sand.u32 %s249, 1
          %s1580 = scalar_lea.sflag [#allocation15], %s1579
          %s1581 = sand.u32 %s249, 1
          %s1582 = smul.addr %s1581, 24
          %s1583 = scalar_lea.vmem [#allocation14], %s1582
          %1585 = dma.done %s1580, 384
        $region92: #{tpu_custom_call.1} parent=83 // pred_fallthru
          _
      $region84: #{tpu_custom_call.1} parent=5 // pred_fallthru
        _
    $region6: #{tpu_custom_call.1} parent=1 // loop_footer
      %s33 = sadd.s32 1, %s29
    $region7: #{tpu_custom_call.1} parent=1 // loop_footer_branch
      %28 = sbr.rel target = $region3
    $region8: #{tpu_custom_call.1} parent=1 // loop_exit
      _
    %1586 = vsyncpa [#allocation3], 1
    %s1587 = scalar_lea.sflag [#allocation3], 1
    %1588 = vsyncpa %s1587, 1
    %1589 = vsyncpa [#allocation6], 1
    %s1590 = scalar_lea.sflag [#allocation6], 1
    %1591 = vsyncpa %s1590, 1
    %1592 = vsyncpa [#allocation9], 1
    %1593 = vsyncpa [#allocation12], 1
    %1594 = vsyncpa [#allocation4], 1
    %s1595 = scalar_lea.sflag [#allocation4], 1
    %1596 = vsyncpa %s1595, 1
    %1597 = vsyncpa [#allocation15], 1
    %s1598 = scalar_lea.sflag [#allocation15], 1
    %1599 = vsyncpa %s1598, 1

</llo_original>
